<compile_context>
chip_gen: v6e
topology: v6e:2x2x1
jax: 0.10.0
libtpu: 0.0.40
codegen_flags: <defaults>
</compile_context>

<pallas_src>
import math

import jax
import jax.numpy as jnp
from jax.experimental import pallas as pl
from jax.experimental.pallas import tpu as pltpu

HIDDEN = 400       # logical hidden size (matches the PyTorch module)
HIDDEN_PAD = 512   # zero-padded hidden size used on-chip (multiple of 128)


def _round_up(n, m):
    return ((n + m - 1) // m) * m


def t_mlp_kernel(xz_ref, w1_ref, b1_ref, w2_ref, b2_ref, w3_ref, b3_ref,
                 w4_ref, b4_ref, o_ref):
    # Layer 1: [x ; z] @ W1 + b1 (concat fused in the wrapper). bf16 MXU dot, f32 acc.
    h = (jnp.dot(xz_ref[...], w1_ref[...], preferred_element_type=jnp.float32)
         + b1_ref[...])
    h = jnp.maximum(h, 0.0)
    # Layer 2
    h = (jnp.dot(h.astype(jnp.bfloat16), w2_ref[...],
                 preferred_element_type=jnp.float32) + b2_ref[...])
    h = jnp.maximum(h, 0.0)
    # Layer 3
    h = (jnp.dot(h.astype(jnp.bfloat16), w3_ref[...],
                 preferred_element_type=jnp.float32) + b3_ref[...])
    h = jnp.maximum(h, 0.0)
    # Layer 4 (out_features=1): VPU multiply + lane reduction, keeps the MXU free.
    o_ref[...] = (jnp.sum(h * w4_ref[...], axis=-1, keepdims=True)
                  + b4_ref[...]).astype(o_ref.dtype)


def t_forward(x, z, params, *, tb=512):
    """x: (B, x_dim) f32, z: (B, z_dim) f32 -> (B, 1) f32."""
    w1, b1, w2, b2, w3, b3, w4, b4 = params
    B = x.shape[0]
    K = x.shape[1] + z.shape[1]
    H = w1.shape[1]

    # Fuse the ConcatLayer here; cast activations to bf16 for the MXU.
    xz = jnp.concatenate([x, z], axis=-1).astype(jnp.bfloat16)

    # Batch tile: 8-row aligned, at most `tb` rows per grid step.
    TB = min(tb, _round_up(B, 8))
    Bp = _round_up(B, TB)
    if Bp != B:
        xz = jnp.pad(xz, ((0, Bp - B), (0, 0)))

    resident = lambda i: (0, 0)  # weights/biases pinned in VMEM across the grid

    out = pl.pallas_call(
        t_mlp_kernel,
        out_shape=jax.ShapeDtypeStruct((Bp, 1), jnp.float32),
        grid=(Bp // TB,),
        in_specs=[
            pl.BlockSpec((TB, K), lambda i: (i, 0)),   # xz batch tile
            pl.BlockSpec((K, H), resident),            # W1 (bf16)
            pl.BlockSpec((1, H), resident),            # b1 (f32)
            pl.BlockSpec((H, H), resident),            # W2 (bf16)
            pl.BlockSpec((1, H), resident),            # b2 (f32)
            pl.BlockSpec((H, H), resident),            # W3 (bf16)
            pl.BlockSpec((1, H), resident),            # b3 (f32)
            pl.BlockSpec((1, H), resident),            # W4 row (f32, VPU reduce)
            pl.BlockSpec((1, 1), resident),            # b4 (f32)
        ],
        out_specs=pl.BlockSpec((TB, 1), lambda i: (i, 0)),
        compiler_params=pltpu.CompilerParams(
            dimension_semantics=("parallel",)),
    )(xz, w1, b1, w2, b2, w3, b3, w4, b4)
    return out[:B]


def init_params(key, x_dim, z_dim, hidden=HIDDEN, hidden_pad=HIDDEN_PAD):
    """PyTorch nn.Linear-style init (uniform +/- 1/sqrt(fan_in)). Weights stored
    pre-transposed as (in, out); hidden zero-padded 400 -> 512; matmul weights in
    bf16, biases and the (1, H) output row kept f32."""
    dims = [(x_dim + z_dim, hidden), (hidden, hidden), (hidden, hidden), (hidden, 1)]
    keys = jax.random.split(key, 2 * len(dims))
    ws, bs = [], []
    for i, (fan_in, fan_out) in enumerate(dims):
        bound = 1.0 / math.sqrt(fan_in)
        w = jax.random.uniform(keys[2 * i], (fan_in, fan_out),
                               minval=-bound, maxval=bound, dtype=jnp.float32)
        b = jax.random.uniform(keys[2 * i + 1], (1, fan_out),
                               minval=-bound, maxval=bound, dtype=jnp.float32)
        ws.append(w)
        bs.append(b)
    w1, w2, w3, w4 = ws
    b1, b2, b3, b4 = bs
    hp = hidden_pad - hidden
    # Zero padding is exact: padded columns/rows and biases are 0 and ReLU(0)=0.
    w1 = jnp.pad(w1, ((0, 0), (0, hp)))
    b1 = jnp.pad(b1, ((0, 0), (0, hp)))
    w2 = jnp.pad(w2, ((0, hp), (0, hp)))
    b2 = jnp.pad(b2, ((0, 0), (0, hp)))
    w3 = jnp.pad(w3, ((0, hp), (0, hp)))
    b3 = jnp.pad(b3, ((0, 0), (0, hp)))
    w4_row = jnp.pad(w4.T, ((0, 0), (0, hp)))  # (1, hidden_pad)
    return (w1.astype(jnp.bfloat16), b1,
            w2.astype(jnp.bfloat16), b2,
            w3.astype(jnp.bfloat16), b3,
            w4_row, b4)


def t_reference(x, z, params):
    """Pure-JAX reference with the same bf16-in / f32-accumulate numerics."""
    w1, b1, w2, b2, w3, b3, w4_row, b4 = params
    xz = jnp.concatenate([x, z], axis=-1).astype(jnp.bfloat16)
    h = jnp.maximum(jnp.dot(xz, w1, preferred_element_type=jnp.float32) + b1, 0.0)
    h = jnp.maximum(jnp.dot(h.astype(jnp.bfloat16), w2,
                            preferred_element_type=jnp.float32) + b2, 0.0)
    h = jnp.maximum(jnp.dot(h.astype(jnp.bfloat16), w3,
                            preferred_element_type=jnp.float32) + b3, 0.0)
    return jnp.sum(h * w4_row, axis=-1, keepdims=True) + b4


if __name__ == "__main__":
    B, x_dim, z_dim = 8, 4, 4
    key = jax.random.PRNGKey(0)
    kx, kz, kp = jax.random.split(key, 3)
    x = jax.random.normal(kx, (B, x_dim), dtype=jnp.float32)
    z = jax.random.normal(kz, (B, z_dim), dtype=jnp.float32)
    params = init_params(kp, x_dim, z_dim)

    out = jax.block_until_ready(t_forward(x, z, params))
    ref = t_reference(x, z, params)

    assert out.shape == (B, 1), out.shape
    assert jnp.allclose(out, ref, atol=1e-2, rtol=1e-2), (out, ref)
    print("KERNEL_OK")
</pallas_src>

<mosaic_0001>
module attributes {stable_mosaic.version = 11 : i64} {
  func.func @t_mlp_kernel(%arg0: i32, %arg1: memref<8x8xbf16, #tpu.memory_space<vmem>>, %arg2: memref<8x512xbf16, #tpu.memory_space<vmem>>, %arg3: memref<1x512xf32, #tpu.memory_space<vmem>>, %arg4: memref<512x512xbf16, #tpu.memory_space<vmem>>, %arg5: memref<1x512xf32, #tpu.memory_space<vmem>>, %arg6: memref<512x512xbf16, #tpu.memory_space<vmem>>, %arg7: memref<1x512xf32, #tpu.memory_space<vmem>>, %arg8: memref<1x512xf32, #tpu.memory_space<vmem>>, %arg9: memref<1x1xf32, #tpu.memory_space<vmem>>, %arg10: memref<8x1xf32, #tpu.memory_space<vmem>>) attributes {dimension_semantics = [#tpu.dimension_semantics<parallel>], iteration_bounds = array<i64: 1>, scalar_prefetch = 0 : i64, scratch_operands = 0 : i64, tpu.core_type = #tpu.core_type<tc>, window_params = [{transform_indices = @transform_0, window_bounds = array<i64: 8, 8>}, {pipeline_mode = #tpu.pipeline_mode<synchronous>, transform_indices = @transform_1, window_bounds = array<i64: 8, 512>}, {pipeline_mode = #tpu.pipeline_mode<synchronous>, transform_indices = @transform_2, window_bounds = array<i64: 1, 512>}, {pipeline_mode = #tpu.pipeline_mode<synchronous>, transform_indices = @transform_3, window_bounds = array<i64: 512, 512>}, {pipeline_mode = #tpu.pipeline_mode<synchronous>, transform_indices = @transform_4, window_bounds = array<i64: 1, 512>}, {pipeline_mode = #tpu.pipeline_mode<synchronous>, transform_indices = @transform_5, window_bounds = array<i64: 512, 512>}, {pipeline_mode = #tpu.pipeline_mode<synchronous>, transform_indices = @transform_6, window_bounds = array<i64: 1, 512>}, {pipeline_mode = #tpu.pipeline_mode<synchronous>, transform_indices = @transform_7, window_bounds = array<i64: 1, 512>}, {pipeline_mode = #tpu.pipeline_mode<synchronous>, transform_indices = @transform_8, window_bounds = array<i64: 1, 1>}, {transform_indices = @transform_9, window_bounds = array<i64: 8, 1>}]} {
    %c0 = arith.constant 0 : index
    %c0_0 = arith.constant 0 : index
    %0 = vector.load %arg1[%c0, %c0_0] : memref<8x8xbf16, #tpu.memory_space<vmem>>, vector<8x8xbf16>
    %c0_1 = arith.constant 0 : index
    %c0_2 = arith.constant 0 : index
    %1 = vector.load %arg2[%c0_1, %c0_2] : memref<8x512xbf16, #tpu.memory_space<vmem>>, vector<8x512xbf16>
    %cst = arith.constant dense<0.000000e+00> : vector<8x512xf32>
    %2 = tpu.matmul %0, %1, %cst {dimension_numbers = #tpu.dot_dimension_numbers<[1], [0], [0], [1], [0, 0, 1, 1], [], []>} : vector<8x8xbf16>, vector<8x512xbf16>, vector<8x512xf32> -> vector<8x512xf32>
    %c0_3 = arith.constant 0 : index
    %c0_4 = arith.constant 0 : index
    %3 = vector.load %arg3[%c0_3, %c0_4] : memref<1x512xf32, #tpu.memory_space<vmem>>, vector<1x512xf32>
    %4 = vector.broadcast %3 : vector<1x512xf32> to vector<8x512xf32>
    %5 = arith.addf %2, %4 : vector<8x512xf32>
    %cst_5 = arith.constant 0.000000e+00 : f32
    %6 = vector.broadcast %cst_5 : f32 to vector<8x512xf32>
    %7 = arith.maximumf %5, %6 : vector<8x512xf32>
    %8 = arith.truncf %7 : vector<8x512xf32> to vector<8x512xbf16>
    %c0_6 = arith.constant 0 : index
    %c0_7 = arith.constant 0 : index
    %9 = vector.load %arg4[%c0_6, %c0_7] : memref<512x512xbf16, #tpu.memory_space<vmem>>, vector<512x512xbf16>
    %cst_8 = arith.constant dense<0.000000e+00> : vector<8x512xf32>
    %10 = tpu.matmul %8, %9, %cst_8 {dimension_numbers = #tpu.dot_dimension_numbers<[1], [0], [0], [1], [0, 0, 1, 1], [], []>} : vector<8x512xbf16>, vector<512x512xbf16>, vector<8x512xf32> -> vector<8x512xf32>
    %c0_9 = arith.constant 0 : index
    %c0_10 = arith.constant 0 : index
    %11 = vector.load %arg5[%c0_9, %c0_10] : memref<1x512xf32, #tpu.memory_space<vmem>>, vector<1x512xf32>
    %12 = vector.broadcast %11 : vector<1x512xf32> to vector<8x512xf32>
    %13 = arith.addf %10, %12 : vector<8x512xf32>
    %cst_11 = arith.constant 0.000000e+00 : f32
    %14 = vector.broadcast %cst_11 : f32 to vector<8x512xf32>
    %15 = arith.maximumf %13, %14 : vector<8x512xf32>
    %16 = arith.truncf %15 : vector<8x512xf32> to vector<8x512xbf16>
    %c0_12 = arith.constant 0 : index
    %c0_13 = arith.constant 0 : index
    %17 = vector.load %arg6[%c0_12, %c0_13] : memref<512x512xbf16, #tpu.memory_space<vmem>>, vector<512x512xbf16>
    %cst_14 = arith.constant dense<0.000000e+00> : vector<8x512xf32>
    %18 = tpu.matmul %16, %17, %cst_14 {dimension_numbers = #tpu.dot_dimension_numbers<[1], [0], [0], [1], [0, 0, 1, 1], [], []>} : vector<8x512xbf16>, vector<512x512xbf16>, vector<8x512xf32> -> vector<8x512xf32>
    %c0_15 = arith.constant 0 : index
    %c0_16 = arith.constant 0 : index
    %19 = vector.load %arg7[%c0_15, %c0_16] : memref<1x512xf32, #tpu.memory_space<vmem>>, vector<1x512xf32>
    %20 = vector.broadcast %19 : vector<1x512xf32> to vector<8x512xf32>
    %21 = arith.addf %18, %20 : vector<8x512xf32>
    %cst_17 = arith.constant 0.000000e+00 : f32
    %22 = vector.broadcast %cst_17 : f32 to vector<8x512xf32>
    %23 = arith.maximumf %21, %22 : vector<8x512xf32>
    %c0_18 = arith.constant 0 : index
    %c0_19 = arith.constant 0 : index
    %24 = vector.load %arg8[%c0_18, %c0_19] : memref<1x512xf32, #tpu.memory_space<vmem>>, vector<1x512xf32>
    %25 = vector.broadcast %24 : vector<1x512xf32> to vector<8x512xf32>
    %26 = arith.mulf %23, %25 : vector<8x512xf32>
    %cst_20 = arith.constant dense<0.000000e+00> : vector<8xf32>
    %27 = vector.multi_reduction <add>, %26, %cst_20 [1] : vector<8x512xf32> to vector<8xf32>
    %28 = vector.shape_cast %27 : vector<8xf32> to vector<8x1xf32>
    %c0_21 = arith.constant 0 : index
    %c0_22 = arith.constant 0 : index
    %29 = vector.load %arg9[%c0_21, %c0_22] : memref<1x1xf32, #tpu.memory_space<vmem>>, vector<1x1xf32>
    %30 = vector.broadcast %29 : vector<1x1xf32> to vector<8x1xf32>
    %31 = arith.addf %28, %30 : vector<8x1xf32>
    %c0_23 = arith.constant 0 : index
    %c0_24 = arith.constant 0 : index
    %32 = vector.load %arg10[%c0_23, %c0_24] : memref<8x1xf32, #tpu.memory_space<vmem>>, vector<8x1xf32>
    tpu.vector_store %arg10[%c0_23, %c0_24], %31 {strides = array<i32>} : memref<8x1xf32, #tpu.memory_space<vmem>>, vector<8x1xf32>,
    return
  }
  func.func @transform_0(%arg0: i32) -> (i32, i32) {
    %c0_i32 = arith.constant 0 : i32
    %c0_i32_0 = arith.constant 0 : i32
    return %arg0, %c0_i32 : i32, i32
  }
  func.func @transform_1(%arg0: i32) -> (i32, i32) {
    %c0_i32 = arith.constant 0 : i32
    %c0_i32_0 = arith.constant 0 : i32
    %c0_i32_1 = arith.constant 0 : i32
    return %c0_i32, %c0_i32_0 : i32, i32
  }
  func.func @transform_2(%arg0: i32) -> (i32, i32) {
    %c0_i32 = arith.constant 0 : i32
    %c0_i32_0 = arith.constant 0 : i32
    %c0_i32_1 = arith.constant 0 : i32
    return %c0_i32, %c0_i32_0 : i32, i32
  }
  func.func @transform_3(%arg0: i32) -> (i32, i32) {
    %c0_i32 = arith.constant 0 : i32
    %c0_i32_0 = arith.constant 0 : i32
    %c0_i32_1 = arith.constant 0 : i32
    return %c0_i32, %c0_i32_0 : i32, i32
  }
  func.func @transform_4(%arg0: i32) -> (i32, i32) {
    %c0_i32 = arith.constant 0 : i32
    %c0_i32_0 = arith.constant 0 : i32
    %c0_i32_1 = arith.constant 0 : i32
    return %c0_i32, %c0_i32_0 : i32, i32
  }
  func.func @transform_5(%arg0: i32) -> (i32, i32) {
    %c0_i32 = arith.constant 0 : i32
    %c0_i32_0 = arith.constant 0 : i32
    %c0_i32_1 = arith.constant 0 : i32
    return %c0_i32, %c0_i32_0 : i32, i32
  }
  func.func @transform_6(%arg0: i32) -> (i32, i32) {
    %c0_i32 = arith.constant 0 : i32
    %c0_i32_0 = arith.constant 0 : i32
    %c0_i32_1 = arith.constant 0 : i32
    return %c0_i32, %c0_i32_0 : i32, i32
  }
  func.func @transform_7(%arg0: i32) -> (i32, i32) {
    %c0_i32 = arith.constant 0 : i32
    %c0_i32_0 = arith.constant 0 : i32
    %c0_i32_1 = arith.constant 0 : i32
    return %c0_i32, %c0_i32_0 : i32, i32
  }
  func.func @transform_8(%arg0: i32) -> (i32, i32) {
    %c0_i32 = arith.constant 0 : i32
    %c0_i32_0 = arith.constant 0 : i32
    %c0_i32_1 = arith.constant 0 : i32
    return %c0_i32, %c0_i32_0 : i32, i32
  }
  func.func @transform_9(%arg0: i32) -> (i32, i32) {
    %c0_i32 = arith.constant 0 : i32
    %c0_i32_0 = arith.constant 0 : i32
    return %arg0, %c0_i32 : i32, i32
  }
}

</mosaic_0001>

<llo_original>
// kernel: tpu_custom_call.1
$region0: #{tpu_custom_call.1}
  #allocation0 [shape = 'u32[]', space=smem, size = 0x4, offset = 0x4, fixed_abs, tag = 'smem constant byte address 0x4 - core index']
  #allocation1 [shape = 'u32[144,128]{1,0:T(1,128)}', space=vmem, size = 0x12000, scoped, tag = 'internal scratch']
  #allocation2 [shape = 'f32[1,1]{1,0:T(1,128)S(1)}', space=vmem, size = 0x200, scoped, tag = 'scoped memory for tpu_custom_call.1']
  %s0 = inlined_call_operand.hbm [shape: bf16[8,8], index: 0, kind: input, shape index: {}]
  %s1 = inlined_call_operand.hbm [shape: bf16[8,512], index: 1, kind: input, shape index: {}]
  %s2 = inlined_call_operand.vmem [shape: f32[1,512], index: 2, kind: input, shape index: {}]
  %s3 = inlined_call_operand.hbm [shape: bf16[512,512], index: 3, kind: input, shape index: {}]
  %s4 = inlined_call_operand.vmem [shape: f32[1,512], index: 4, kind: input, shape index: {}]
  %s5 = inlined_call_operand.hbm [shape: bf16[512,512], index: 5, kind: input, shape index: {}]
  %s6 = inlined_call_operand.vmem [shape: f32[1,512], index: 6, kind: input, shape index: {}]
  %s7 = inlined_call_operand.hbm [shape: f32[1,512], index: 7, kind: input, shape index: {}]
  %s8 = inlined_call_operand.<no memory space> [shape: f32[1,1], index: 8, kind: input, shape index: {}]
  %s9 = inlined_call_operand.vmem [shape: f32[8,1], index: 9, kind: output, shape index: {}]
  %s10 = sld [smem:[#allocation0]]
  $region66: #{tpu_custom_call.1} parent=0
    _
  %s12 = ssub.s32 1, %s10
  %s13 = scalar_select 0, %s12, %s10
  %v14 = vstv %s8
  %15 = vst [vmem:[#allocation2] sm:$0x1] %v14
  $region1: #{tpu_custom_call.1} parent=0
    #allocation3 [shape = 'u8[2048]{0}', space=vmem, size = 0x800, scoped, tag = 'input window, operand 0, single buffered']
    #allocation4 [shape = 's32[1]{0}', space=sflag, size = 0x4, scoped, tag = 'scoped memory for tpu_custom_call.1']
    #allocation5 [shape = 'u8[8192]{0}', space=vmem, size = 0x2000, scoped, tag = 'input window, operand 1, single buffered']
    #allocation6 [shape = 's32[1]{0}', space=sflag, size = 0x4, scoped, tag = 'scoped memory for tpu_custom_call.1']
    #allocation7 [shape = 'u8[524288]{0}', space=vmem, size = 0x80000, scoped, tag = 'input window, operand 3, single buffered']
    #allocation8 [shape = 'u8[524288]{0}', space=vmem, size = 0x80000, scoped, tag = 'input window, operand 5, single buffered']
    #allocation9 [shape = 's32[1]{0}', space=sflag, size = 0x4, scoped, tag = 'scoped memory for tpu_custom_call.1']
    #allocation10 [shape = 'u8[2048]{0}', space=vmem, size = 0x800, scoped, tag = 'input window, operand 7, single buffered']
    %16 = vsyncpa [#allocation4], 0
    %17 = vsyncpa [#allocation6], 0
    %18 = vsyncpa [#allocation9], 0
    // Predicated region
    $region2: #{tpu_custom_call.1} parent=1 // pred_check
      _
    $region3: #{tpu_custom_call.1} parent=1 // pred_check_branch
      %20 = sbr.rel (0) target = $region5
    $region4: #{tpu_custom_call.1} parent=1 // pred_region
      %s22 = ssub.s32 64, 64
      %23 = vsyncadd [#allocation4], %s22
      %s25 = sshll.u32 [#allocation3], 4
      %s26 = int_to_ptr.vmem [resolvable:$true] %s25
      %28 = dma.hbm_to_vmem [thread:$0]  %s0, 64, %s26, [#allocation4]
    $region5: #{tpu_custom_call.1} parent=1 // pred_fallthru
      _
    // Predicated region
    $region6: #{tpu_custom_call.1} parent=1 // pred_check
      _
    $region7: #{tpu_custom_call.1} parent=1 // pred_check_branch
      %30 = sbr.rel (0) target = $region9
    $region8: #{tpu_custom_call.1} parent=1 // pred_region
      %s32 = ssub.s32 256, 256
      %33 = vsyncadd [#allocation6], %s32
      %s35 = sshll.u32 [#allocation5], 4
      %s36 = int_to_ptr.vmem [resolvable:$true] %s35
      %38 = dma.hbm_to_vmem [thread:$0]  %s1, 256, %s36, [#allocation6]
    $region9: #{tpu_custom_call.1} parent=1 // pred_fallthru
      _
    // Predicated region
    $region10: #{tpu_custom_call.1} parent=1 // pred_check
      _
    $region11: #{tpu_custom_call.1} parent=1 // pred_check_branch
      %40 = sbr.rel (0) target = $region13
    $region12: #{tpu_custom_call.1} parent=1 // pred_region
      _
    $region13: #{tpu_custom_call.1} parent=1 // pred_fallthru
      _
    // Predicated region
    $region14: #{tpu_custom_call.1} parent=1 // pred_check
      _
    $region15: #{tpu_custom_call.1} parent=1 // pred_check_branch
      %42 = sbr.rel (0) target = $region17
    $region16: #{tpu_custom_call.1} parent=1 // pred_region
      %s44 = ssub.s32 16384, 16384
      %45 = vsyncadd [#allocation6], %s44
      %s46 = sshll.u32 [#allocation7], 4
      %s47 = int_to_ptr.vmem [resolvable:$true] %s46
      %52 = dma.hbm_to_vmem [thread:$0]  %s3, 16384, %s47, [#allocation6], 256, 256, 16
    $region17: #{tpu_custom_call.1} parent=1 // pred_fallthru
      _
    // Predicated region
    $region18: #{tpu_custom_call.1} parent=1 // pred_check
      _
    $region19: #{tpu_custom_call.1} parent=1 // pred_check_branch
      %54 = sbr.rel (0) target = $region21
    $region20: #{tpu_custom_call.1} parent=1 // pred_region
      _
    $region21: #{tpu_custom_call.1} parent=1 // pred_fallthru
      _
    // Predicated region
    $region22: #{tpu_custom_call.1} parent=1 // pred_check
      _
    $region23: #{tpu_custom_call.1} parent=1 // pred_check_branch
      %56 = sbr.rel (0) target = $region25
    $region24: #{tpu_custom_call.1} parent=1 // pred_region
      %s58 = ssub.s32 16384, 16384
      %59 = vsyncadd [#allocation9], %s58
      %s60 = sshll.u32 [#allocation8], 4
      %s61 = int_to_ptr.vmem [resolvable:$true] %s60
      %66 = dma.hbm_to_vmem [thread:$0]  %s5, 16384, %s61, [#allocation9], 256, 256, 16
    $region25: #{tpu_custom_call.1} parent=1 // pred_fallthru
      _
    // Predicated region
    $region26: #{tpu_custom_call.1} parent=1 // pred_check
      _
    $region27: #{tpu_custom_call.1} parent=1 // pred_check_branch
      %68 = sbr.rel (0) target = $region29
    $region28: #{tpu_custom_call.1} parent=1 // pred_region
      _
    $region29: #{tpu_custom_call.1} parent=1 // pred_fallthru
      _
    // Predicated region
    $region30: #{tpu_custom_call.1} parent=1 // pred_check
      _
    $region31: #{tpu_custom_call.1} parent=1 // pred_check_branch
      %70 = sbr.rel (0) target = $region33
    $region32: #{tpu_custom_call.1} parent=1 // pred_region
      %s72 = ssub.s32 64, 64
      %73 = vsyncadd [#allocation9], %s72
      %s75 = sshll.u32 [#allocation10], 4
      %s76 = int_to_ptr.vmem [resolvable:$true] %s75
      %78 = dma.hbm_to_vmem [thread:$0]  %s7, 64, %s76, [#allocation9]
    $region33: #{tpu_custom_call.1} parent=1 // pred_fallthru
      _
    // Predicated region
    $region34: #{tpu_custom_call.1} parent=1 // pred_check
      _
    $region35: #{tpu_custom_call.1} parent=1 // pred_check_branch
      %80 = sbr.rel (0) target = $region37
    $region36: #{tpu_custom_call.1} parent=1 // pred_region
      _
    $region37: #{tpu_custom_call.1} parent=1 // pred_fallthru
      _
    // Predicated region
    $region38: #{tpu_custom_call.1} parent=1 // pred_check
      _
    $region39: #{tpu_custom_call.1} parent=1 // pred_check_branch
      %82 = sbr.rel (0) target = $region41
    $region40: #{tpu_custom_call.1} parent=1 // pred_region
      %83 = dma.done [#allocation4], 64
    $region41: #{tpu_custom_call.1} parent=1 // pred_fallthru
      _
    // Predicated region
    $region42: #{tpu_custom_call.1} parent=1 // pred_check
      _
    $region43: #{tpu_custom_call.1} parent=1 // pred_check_branch
      %85 = sbr.rel (0) target = $region45
    $region44: #{tpu_custom_call.1} parent=1 // pred_region
      %86 = dma.done [#allocation6], 256
    $region45: #{tpu_custom_call.1} parent=1 // pred_fallthru
      _
    // Predicated region
    $region46: #{tpu_custom_call.1} parent=1 // pred_check
      _
    $region47: #{tpu_custom_call.1} parent=1 // pred_check_branch
      %88 = sbr.rel (0) target = $region49
    $region48: #{tpu_custom_call.1} parent=1 // pred_region
      %89 = dma.done [#allocation6], 16384
    $region49: #{tpu_custom_call.1} parent=1 // pred_fallthru
      _
    // Predicated region
    $region50: #{tpu_custom_call.1} parent=1 // pred_check
      _
    $region51: #{tpu_custom_call.1} parent=1 // pred_check_branch
      %91 = sbr.rel (0) target = $region53
    $region52: #{tpu_custom_call.1} parent=1 // pred_region
      %92 = dma.done [#allocation9], 16384
    $region53: #{tpu_custom_call.1} parent=1 // pred_fallthru
      _
    // Predicated region
    $region54: #{tpu_custom_call.1} parent=1 // pred_check
      _
    $region55: #{tpu_custom_call.1} parent=1 // pred_check_branch
      %94 = sbr.rel (0) target = $region57
    $region56: #{tpu_custom_call.1} parent=1 // pred_region
      %95 = dma.done [#allocation9], 64
    $region57: #{tpu_custom_call.1} parent=1 // pred_fallthru
      _
    %v97 = vld [vmem:[#allocation3] sm:$0xf]
    %v98 = vld [vmem:[#allocation5] sm:$0xff]
    %v99 = vld [vmem:[#allocation5 + $0x8] sm:$0xff]
    %v100 = vld [vmem:[%s2] sm:$0xf]
    %v102 = vlaneseq
    %v103 = vshrl.u32 %v102, 7
    %v104 = vsub.s32 0, %v103
    %v105 = vrot.slane %v100, %v104
    %v106 = vlaneseq
    %v107 = vshrl.u32 %v106, 7
    %v108 = vsub.s32 1, %v107
    %v109 = vrot.slane %v100, %v108
    %v110 = vlaneseq
    %v111 = vshrl.u32 %v110, 7
    %v112 = vsub.s32 2, %v111
    %v113 = vrot.slane %v100, %v112
    %v114 = vlaneseq
    %v115 = vshrl.u32 %v114, 7
    %v116 = vsub.s32 3, %v115
    %v117 = vrot.slane %v100, %v116
    %v124 = vunpack.c.l.b16 %v98
    %v125 = vunpack.c.h.b16 %v98
    %v126 = vunpack.c.l.b16 %v99
    %v127 = vunpack.c.h.b16 %v99
    %v128 = vpack.c.b16 %v124, %v124
    %v129 = vpack.c.b16 %v125, %v125
    %v130 = vpack.c.b16 %v126, %v126
    %v131 = vpack.c.b16 %v127, %v127
    %vm132 = vcmask 64512
    %v134 = vsel %vm132, %v97, 0
    %vm136 = vcmask 1043456
    %v138 = vsel %vm136, %v128, 0
    %v141 = vsel %vm136, %v129, 0
    %v144 = vsel %vm136, %v130, 0
    %v147 = vsel %vm136, %v131, 0
    %149 = vmatprep.subr.bf16.mxu0 0
    %150 = vmatpush1.bf16.msra.mxu0 0
    %151 = vmatprep.subr.bf16.mxu0 0
    %152 = vmatpush1.bf16.msra.mxu0 0
    %153 = vmatprep.subr.bf16.mxu0 0
    %154 = vmatpush1.bf16.msra.mxu0 0
    %155 = vmatprep.subr.bf16.mxu0 0
    %156 = vmatpush1.bf16.msra.mxu0 0
    %157 = vmatprep.subr.bf16.mxu0 0
    %158 = vmatpush1.bf16.msra.mxu0 0
    %159 = vmatprep.subr.bf16.mxu0 0
    %160 = vmatpush1.bf16.msra.mxu0 0
    %161 = vmatprep.subr.bf16.mxu0 0
    %162 = vmatpush1.bf16.msra.mxu0 0
    %163 = vmatprep.subr.bf16.mxu0 %v141
    %164 = vmatpush1.bf16.msra.mxu0 %v138
    %165 = vmatprep.subr.bf16.mxu0 0
    %166 = vmatpush2.bf16.msra.mxu0 0
    %167 = vmatprep.subr.bf16.mxu0 0
    %168 = vmatpush2.bf16.msra.mxu0 0
    %169 = vmatprep.subr.bf16.mxu0 0
    %170 = vmatpush2.bf16.msra.mxu0 0
    %171 = vmatprep.subr.bf16.mxu0 0
    %172 = vmatpush2.bf16.msra.mxu0 0
    %173 = vmatprep.subr.bf16.mxu0 0
    %174 = vmatpush2.bf16.msra.mxu0 0
    %175 = vmatprep.subr.bf16.mxu0 0
    %176 = vmatpush2.bf16.msra.mxu0 0
    %177 = vmatprep.subr.bf16.mxu0 0
    %178 = vmatpush2.bf16.msra.mxu0 0
    %179 = vmatprep.subr.bf16.mxu0 0
    %180 = vmatpush2.bf16.msra.mxu0 0
    %181 = vmatprep.mubr.bf16.mxu0 0
    %182 = vmatmul.mubr.bf16.gmra.mxu0 %v134
    %v183 = vpop.f32.mrf.mxu0
    %v184 = vadd.f32 %v105, %v183
    %v185 = vpop.f32.mrf.mxu0
    %v186 = vadd.f32 %v109, %v185
    %v187 = vpop.f32.mrf.mxu0
    %v188 = vpop.f32.mrf.mxu0
    %189 = vdwg.mxu0
    %190 = vmatprep.subr.bf16.mxu0 0
    %191 = vmatpush1.bf16.msra.mxu0 0
    %192 = vmatprep.subr.bf16.mxu0 0
    %193 = vmatpush1.bf16.msra.mxu0 0
    %194 = vmatprep.subr.bf16.mxu0 0
    %195 = vmatpush1.bf16.msra.mxu0 0
    %196 = vmatprep.subr.bf16.mxu0 0
    %197 = vmatpush1.bf16.msra.mxu0 0
    %198 = vmatprep.subr.bf16.mxu0 0
    %199 = vmatpush1.bf16.msra.mxu0 0
    %200 = vmatprep.subr.bf16.mxu0 0
    %201 = vmatpush1.bf16.msra.mxu0 0
    %202 = vmatprep.subr.bf16.mxu0 0
    %203 = vmatpush1.bf16.msra.mxu0 0
    %204 = vmatprep.subr.bf16.mxu0 %v147
    %205 = vmatpush1.bf16.msra.mxu0 %v144
    %206 = vmatprep.subr.bf16.mxu0 0
    %207 = vmatpush2.bf16.msra.mxu0 0
    %208 = vmatprep.subr.bf16.mxu0 0
    %209 = vmatpush2.bf16.msra.mxu0 0
    %210 = vmatprep.subr.bf16.mxu0 0
    %211 = vmatpush2.bf16.msra.mxu0 0
    %212 = vmatprep.subr.bf16.mxu0 0
    %213 = vmatpush2.bf16.msra.mxu0 0
    %214 = vmatprep.subr.bf16.mxu0 0
    %215 = vmatpush2.bf16.msra.mxu0 0
    %216 = vmatprep.subr.bf16.mxu0 0
    %217 = vmatpush2.bf16.msra.mxu0 0
    %218 = vmatprep.subr.bf16.mxu0 0
    %219 = vmatpush2.bf16.msra.mxu0 0
    %220 = vmatprep.subr.bf16.mxu0 0
    %221 = vmatpush2.bf16.msra.mxu0 0
    %222 = vmatprep.mubr.bf16.mxu0 0
    %223 = vmatmul.mubr.bf16.gmra.mxu0 %v134
    %v224 = vpop.f32.mrf.mxu0
    %v225 = vadd.f32 %v113, %v224
    %v226 = vpop.f32.mrf.mxu0
    %v227 = vadd.f32 %v117, %v226
    %v228 = vpop.f32.mrf.mxu0
    %v229 = vpop.f32.mrf.mxu0
    %230 = vdwg.mxu0
    %v231 = vmax.f32 %v184, 0.0
    %v232 = vmax.f32 %v186, 0.0
    %v233 = vmax.f32 %v225, 0.0
    %v234 = vmax.f32 %v227, 0.0
    %v235 = vpack.c.bf16 %v231, %v231
    %v236 = vpack.c.bf16 %v232, %v232
    %v237 = vpack.c.bf16 %v233, %v233
    %v238 = vpack.c.bf16 %v234, %v234
    %v239 = vld [vmem:[#allocation7] sm:$0xff]
    %v240 = vld [vmem:[#allocation7 + $0x8] sm:$0xff]
    %v241 = vld [vmem:[#allocation7 + $0x10] sm:$0xff]
    %v242 = vld [vmem:[#allocation7 + $0x18] sm:$0xff]
    %v243 = vld [vmem:[#allocation7 + $0x20] sm:$0xff]
    %v244 = vld [vmem:[#allocation7 + $0x28] sm:$0xff]
    %v245 = vld [vmem:[#allocation7 + $0x30] sm:$0xff]
    %v246 = vld [vmem:[#allocation7 + $0x38] sm:$0xff]
    %v247 = vld [vmem:[#allocation7 + $0x40] sm:$0xff]
    %v248 = vld [vmem:[#allocation7 + $0x48] sm:$0xff]
    %v249 = vld [vmem:[#allocation7 + $0x50] sm:$0xff]
    %v250 = vld [vmem:[#allocation7 + $0x58] sm:$0xff]
    %v251 = vld [vmem:[#allocation7 + $0x60] sm:$0xff]
    %v252 = vld [vmem:[#allocation7 + $0x68] sm:$0xff]
    %v253 = vld [vmem:[#allocation7 + $0x70] sm:$0xff]
    %v254 = vld [vmem:[#allocation7 + $0x78] sm:$0xff]
    %v255 = vld [vmem:[#allocation7 + $0x80] sm:$0xff]
    %v256 = vld [vmem:[#allocation7 + $0x88] sm:$0xff]
    %v257 = vld [vmem:[#allocation7 + $0x90] sm:$0xff]
    %v258 = vld [vmem:[#allocation7 + $0x98] sm:$0xff]
    %v259 = vld [vmem:[#allocation7 + $0xa0] sm:$0xff]
    %v260 = vld [vmem:[#allocation7 + $0xa8] sm:$0xff]
    %v261 = vld [vmem:[#allocation7 + $0xb0] sm:$0xff]
    %v262 = vld [vmem:[#allocation7 + $0xb8] sm:$0xff]
    %v263 = vld [vmem:[#allocation7 + $0xc0] sm:$0xff]
    %v264 = vld [vmem:[#allocation7 + $0xc8] sm:$0xff]
    %v265 = vld [vmem:[#allocation7 + $0xd0] sm:$0xff]
    %v266 = vld [vmem:[#allocation7 + $0xd8] sm:$0xff]
    %v267 = vld [vmem:[#allocation7 + $0xe0] sm:$0xff]
    %v268 = vld [vmem:[#allocation7 + $0xe8] sm:$0xff]
    %v269 = vld [vmem:[#allocation7 + $0xf0] sm:$0xff]
    %v270 = vld [vmem:[#allocation7 + $0xf8] sm:$0xff]
    %v271 = vld [vmem:[#allocation7 + $0x100] sm:$0xff]
    %v272 = vld [vmem:[#allocation7 + $0x108] sm:$0xff]
    %v273 = vld [vmem:[#allocation7 + $0x110] sm:$0xff]
    %v274 = vld [vmem:[#allocation7 + $0x118] sm:$0xff]
    %v275 = vld [vmem:[#allocation7 + $0x120] sm:$0xff]
    %v276 = vld [vmem:[#allocation7 + $0x128] sm:$0xff]
    %v277 = vld [vmem:[#allocation7 + $0x130] sm:$0xff]
    %v278 = vld [vmem:[#allocation7 + $0x138] sm:$0xff]
    %v279 = vld [vmem:[#allocation7 + $0x140] sm:$0xff]
    %v280 = vld [vmem:[#allocation7 + $0x148] sm:$0xff]
    %v281 = vld [vmem:[#allocation7 + $0x150] sm:$0xff]
    %v282 = vld [vmem:[#allocation7 + $0x158] sm:$0xff]
    %v283 = vld [vmem:[#allocation7 + $0x160] sm:$0xff]
    %v284 = vld [vmem:[#allocation7 + $0x168] sm:$0xff]
    %v285 = vld [vmem:[#allocation7 + $0x170] sm:$0xff]
    %v286 = vld [vmem:[#allocation7 + $0x178] sm:$0xff]
    %v287 = vld [vmem:[#allocation7 + $0x180] sm:$0xff]
    %v288 = vld [vmem:[#allocation7 + $0x188] sm:$0xff]
    %v289 = vld [vmem:[#allocation7 + $0x190] sm:$0xff]
    %v290 = vld [vmem:[#allocation7 + $0x198] sm:$0xff]
    %v291 = vld [vmem:[#allocation7 + $0x1a0] sm:$0xff]
    %v292 = vld [vmem:[#allocation7 + $0x1a8] sm:$0xff]
    %v293 = vld [vmem:[#allocation7 + $0x1b0] sm:$0xff]
    %v294 = vld [vmem:[#allocation7 + $0x1b8] sm:$0xff]
    %v295 = vld [vmem:[#allocation7 + $0x1c0] sm:$0xff]
    %v296 = vld [vmem:[#allocation7 + $0x1c8] sm:$0xff]
    %v297 = vld [vmem:[#allocation7 + $0x1d0] sm:$0xff]
    %v298 = vld [vmem:[#allocation7 + $0x1d8] sm:$0xff]
    %v299 = vld [vmem:[#allocation7 + $0x1e0] sm:$0xff]
    %v300 = vld [vmem:[#allocation7 + $0x1e8] sm:$0xff]
    %v301 = vld [vmem:[#allocation7 + $0x1f0] sm:$0xff]
    %v302 = vld [vmem:[#allocation7 + $0x1f8] sm:$0xff]
    %v303 = vld [vmem:[#allocation7 + $0x200] sm:$0xff]
    %v304 = vld [vmem:[#allocation7 + $0x208] sm:$0xff]
    %v305 = vld [vmem:[#allocation7 + $0x210] sm:$0xff]
    %v306 = vld [vmem:[#allocation7 + $0x218] sm:$0xff]
    %v307 = vld [vmem:[#allocation7 + $0x220] sm:$0xff]
    %v308 = vld [vmem:[#allocation7 + $0x228] sm:$0xff]
    %v309 = vld [vmem:[#allocation7 + $0x230] sm:$0xff]
    %v310 = vld [vmem:[#allocation7 + $0x238] sm:$0xff]
    %v311 = vld [vmem:[#allocation7 + $0x240] sm:$0xff]
    %v312 = vld [vmem:[#allocation7 + $0x248] sm:$0xff]
    %v313 = vld [vmem:[#allocation7 + $0x250] sm:$0xff]
    %v314 = vld [vmem:[#allocation7 + $0x258] sm:$0xff]
    %v315 = vld [vmem:[#allocation7 + $0x260] sm:$0xff]
    %v316 = vld [vmem:[#allocation7 + $0x268] sm:$0xff]
    %v317 = vld [vmem:[#allocation7 + $0x270] sm:$0xff]
    %v318 = vld [vmem:[#allocation7 + $0x278] sm:$0xff]
    %v319 = vld [vmem:[#allocation7 + $0x280] sm:$0xff]
    %v320 = vld [vmem:[#allocation7 + $0x288] sm:$0xff]
    %v321 = vld [vmem:[#allocation7 + $0x290] sm:$0xff]
    %v322 = vld [vmem:[#allocation7 + $0x298] sm:$0xff]
    %v323 = vld [vmem:[#allocation7 + $0x2a0] sm:$0xff]
    %v324 = vld [vmem:[#allocation7 + $0x2a8] sm:$0xff]
    %v325 = vld [vmem:[#allocation7 + $0x2b0] sm:$0xff]
    %v326 = vld [vmem:[#allocation7 + $0x2b8] sm:$0xff]
    %v327 = vld [vmem:[#allocation7 + $0x2c0] sm:$0xff]
    %v328 = vld [vmem:[#allocation7 + $0x2c8] sm:$0xff]
    %v329 = vld [vmem:[#allocation7 + $0x2d0] sm:$0xff]
    %v330 = vld [vmem:[#allocation7 + $0x2d8] sm:$0xff]
    %v331 = vld [vmem:[#allocation7 + $0x2e0] sm:$0xff]
    %v332 = vld [vmem:[#allocation7 + $0x2e8] sm:$0xff]
    %v333 = vld [vmem:[#allocation7 + $0x2f0] sm:$0xff]
    %v334 = vld [vmem:[#allocation7 + $0x2f8] sm:$0xff]
    %v335 = vld [vmem:[#allocation7 + $0x300] sm:$0xff]
    %v336 = vld [vmem:[#allocation7 + $0x308] sm:$0xff]
    %v337 = vld [vmem:[#allocation7 + $0x310] sm:$0xff]
    %v338 = vld [vmem:[#allocation7 + $0x318] sm:$0xff]
    %v339 = vld [vmem:[#allocation7 + $0x320] sm:$0xff]
    %v340 = vld [vmem:[#allocation7 + $0x328] sm:$0xff]
    %v341 = vld [vmem:[#allocation7 + $0x330] sm:$0xff]
    %v342 = vld [vmem:[#allocation7 + $0x338] sm:$0xff]
    %v343 = vld [vmem:[#allocation7 + $0x340] sm:$0xff]
    %v344 = vld [vmem:[#allocation7 + $0x348] sm:$0xff]
    %v345 = vld [vmem:[#allocation7 + $0x350] sm:$0xff]
    %v346 = vld [vmem:[#allocation7 + $0x358] sm:$0xff]
    %v347 = vld [vmem:[#allocation7 + $0x360] sm:$0xff]
    %v348 = vld [vmem:[#allocation7 + $0x368] sm:$0xff]
    %v349 = vld [vmem:[#allocation7 + $0x370] sm:$0xff]
    %v350 = vld [vmem:[#allocation7 + $0x378] sm:$0xff]
    %v351 = vld [vmem:[#allocation7 + $0x380] sm:$0xff]
    %v352 = vld [vmem:[#allocation7 + $0x388] sm:$0xff]
    %v353 = vld [vmem:[#allocation7 + $0x390] sm:$0xff]
    %v354 = vld [vmem:[#allocation7 + $0x398] sm:$0xff]
    %v355 = vld [vmem:[#allocation7 + $0x3a0] sm:$0xff]
    %v356 = vld [vmem:[#allocation7 + $0x3a8] sm:$0xff]
    %v357 = vld [vmem:[#allocation7 + $0x3b0] sm:$0xff]
    %v358 = vld [vmem:[#allocation7 + $0x3b8] sm:$0xff]
    %v359 = vld [vmem:[#allocation7 + $0x3c0] sm:$0xff]
    %v360 = vld [vmem:[#allocation7 + $0x3c8] sm:$0xff]
    %v361 = vld [vmem:[#allocation7 + $0x3d0] sm:$0xff]
    %v362 = vld [vmem:[#allocation7 + $0x3d8] sm:$0xff]
    %v363 = vld [vmem:[#allocation7 + $0x3e0] sm:$0xff]
    %v364 = vld [vmem:[#allocation7 + $0x3e8] sm:$0xff]
    %v365 = vld [vmem:[#allocation7 + $0x3f0] sm:$0xff]
    %v366 = vld [vmem:[#allocation7 + $0x3f8] sm:$0xff]
    %v367 = vld [vmem:[%s4] sm:$0xf]
    %v369 = vlaneseq
    %v370 = vshrl.u32 %v369, 7
    %v371 = vsub.s32 0, %v370
    %v372 = vrot.slane %v367, %v371
    %v373 = vlaneseq
    %v374 = vshrl.u32 %v373, 7
    %v375 = vsub.s32 1, %v374
    %v376 = vrot.slane %v367, %v375
    %v377 = vlaneseq
    %v378 = vshrl.u32 %v377, 7
    %v379 = vsub.s32 2, %v378
    %v380 = vrot.slane %v367, %v379
    %v381 = vlaneseq
    %v382 = vshrl.u32 %v381, 7
    %v383 = vsub.s32 3, %v382
    %v384 = vrot.slane %v367, %v383
    %v517 = vunpack.c.l.b16 %v239
    %v518 = vunpack.c.h.b16 %v239
    %v519 = vunpack.c.l.b16 %v240
    %v520 = vunpack.c.h.b16 %v240
    %v521 = vunpack.c.l.b16 %v241
    %v522 = vunpack.c.h.b16 %v241
    %v523 = vunpack.c.l.b16 %v242
    %v524 = vunpack.c.h.b16 %v242
    %v525 = vunpack.c.l.b16 %v243
    %v526 = vunpack.c.h.b16 %v243
    %v527 = vunpack.c.l.b16 %v244
    %v528 = vunpack.c.h.b16 %v244
    %v529 = vunpack.c.l.b16 %v245
    %v530 = vunpack.c.h.b16 %v245
    %v531 = vunpack.c.l.b16 %v246
    %v532 = vunpack.c.h.b16 %v246
    %v533 = vunpack.c.l.b16 %v247
    %v534 = vunpack.c.h.b16 %v247
    %v535 = vunpack.c.l.b16 %v248
    %v536 = vunpack.c.h.b16 %v248
    %v537 = vunpack.c.l.b16 %v249
    %v538 = vunpack.c.h.b16 %v249
    %v539 = vunpack.c.l.b16 %v250
    %v540 = vunpack.c.h.b16 %v250
    %v541 = vunpack.c.l.b16 %v251
    %v542 = vunpack.c.h.b16 %v251
    %v543 = vunpack.c.l.b16 %v252
    %v544 = vunpack.c.h.b16 %v252
    %v545 = vunpack.c.l.b16 %v253
    %v546 = vunpack.c.h.b16 %v253
    %v547 = vunpack.c.l.b16 %v254
    %v548 = vunpack.c.h.b16 %v254
    %v549 = vunpack.c.l.b16 %v255
    %v550 = vunpack.c.h.b16 %v255
    %v551 = vunpack.c.l.b16 %v256
    %v552 = vunpack.c.h.b16 %v256
    %v553 = vunpack.c.l.b16 %v257
    %v554 = vunpack.c.h.b16 %v257
    %v555 = vunpack.c.l.b16 %v258
    %v556 = vunpack.c.h.b16 %v258
    %v557 = vunpack.c.l.b16 %v259
    %v558 = vunpack.c.h.b16 %v259
    %v559 = vunpack.c.l.b16 %v260
    %v560 = vunpack.c.h.b16 %v260
    %v561 = vunpack.c.l.b16 %v261
    %v562 = vunpack.c.h.b16 %v261
    %v563 = vunpack.c.l.b16 %v262
    %v564 = vunpack.c.h.b16 %v262
    %v565 = vunpack.c.l.b16 %v263
    %v566 = vunpack.c.h.b16 %v263
    %v567 = vunpack.c.l.b16 %v264
    %v568 = vunpack.c.h.b16 %v264
    %v569 = vunpack.c.l.b16 %v265
    %v570 = vunpack.c.h.b16 %v265
    %v571 = vunpack.c.l.b16 %v266
    %v572 = vunpack.c.h.b16 %v266
    %v573 = vunpack.c.l.b16 %v267
    %v574 = vunpack.c.h.b16 %v267
    %v575 = vunpack.c.l.b16 %v268
    %v576 = vunpack.c.h.b16 %v268
    %v577 = vunpack.c.l.b16 %v269
    %v578 = vunpack.c.h.b16 %v269
    %v579 = vunpack.c.l.b16 %v270
    %v580 = vunpack.c.h.b16 %v270
    %v581 = vunpack.c.l.b16 %v271
    %v582 = vunpack.c.h.b16 %v271
    %v583 = vunpack.c.l.b16 %v272
    %v584 = vunpack.c.h.b16 %v272
    %v585 = vunpack.c.l.b16 %v273
    %v586 = vunpack.c.h.b16 %v273
    %v587 = vunpack.c.l.b16 %v274
    %v588 = vunpack.c.h.b16 %v274
    %v589 = vunpack.c.l.b16 %v275
    %v590 = vunpack.c.h.b16 %v275
    %v591 = vunpack.c.l.b16 %v276
    %v592 = vunpack.c.h.b16 %v276
    %v593 = vunpack.c.l.b16 %v277
    %v594 = vunpack.c.h.b16 %v277
    %v595 = vunpack.c.l.b16 %v278
    %v596 = vunpack.c.h.b16 %v278
    %v597 = vunpack.c.l.b16 %v279
    %v598 = vunpack.c.h.b16 %v279
    %v599 = vunpack.c.l.b16 %v280
    %v600 = vunpack.c.h.b16 %v280
    %v601 = vunpack.c.l.b16 %v281
    %v602 = vunpack.c.h.b16 %v281
    %v603 = vunpack.c.l.b16 %v282
    %v604 = vunpack.c.h.b16 %v282
    %v605 = vunpack.c.l.b16 %v283
    %v606 = vunpack.c.h.b16 %v283
    %v607 = vunpack.c.l.b16 %v284
    %v608 = vunpack.c.h.b16 %v284
    %v609 = vunpack.c.l.b16 %v285
    %v610 = vunpack.c.h.b16 %v285
    %v611 = vunpack.c.l.b16 %v286
    %v612 = vunpack.c.h.b16 %v286
    %v613 = vunpack.c.l.b16 %v287
    %v614 = vunpack.c.h.b16 %v287
    %v615 = vunpack.c.l.b16 %v288
    %v616 = vunpack.c.h.b16 %v288
    %v617 = vunpack.c.l.b16 %v289
    %v618 = vunpack.c.h.b16 %v289
    %v619 = vunpack.c.l.b16 %v290
    %v620 = vunpack.c.h.b16 %v290
    %v621 = vunpack.c.l.b16 %v291
    %v622 = vunpack.c.h.b16 %v291
    %v623 = vunpack.c.l.b16 %v292
    %v624 = vunpack.c.h.b16 %v292
    %v625 = vunpack.c.l.b16 %v293
    %v626 = vunpack.c.h.b16 %v293
    %v627 = vunpack.c.l.b16 %v294
    %v628 = vunpack.c.h.b16 %v294
    %v629 = vunpack.c.l.b16 %v295
    %v630 = vunpack.c.h.b16 %v295
    %v631 = vunpack.c.l.b16 %v296
    %v632 = vunpack.c.h.b16 %v296
    %v633 = vunpack.c.l.b16 %v297
    %v634 = vunpack.c.h.b16 %v297
    %v635 = vunpack.c.l.b16 %v298
    %v636 = vunpack.c.h.b16 %v298
    %v637 = vunpack.c.l.b16 %v299
    %v638 = vunpack.c.h.b16 %v299
    %v639 = vunpack.c.l.b16 %v300
    %v640 = vunpack.c.h.b16 %v300
    %v641 = vunpack.c.l.b16 %v301
    %v642 = vunpack.c.h.b16 %v301
    %v643 = vunpack.c.l.b16 %v302
    %v644 = vunpack.c.h.b16 %v302
    %v645 = vunpack.c.l.b16 %v303
    %v646 = vunpack.c.h.b16 %v303
    %v647 = vunpack.c.l.b16 %v304
    %v648 = vunpack.c.h.b16 %v304
    %v649 = vunpack.c.l.b16 %v305
    %v650 = vunpack.c.h.b16 %v305
    %v651 = vunpack.c.l.b16 %v306
    %v652 = vunpack.c.h.b16 %v306
    %v653 = vunpack.c.l.b16 %v307
    %v654 = vunpack.c.h.b16 %v307
    %v655 = vunpack.c.l.b16 %v308
    %v656 = vunpack.c.h.b16 %v308
    %v657 = vunpack.c.l.b16 %v309
    %v658 = vunpack.c.h.b16 %v309
    %v659 = vunpack.c.l.b16 %v310
    %v660 = vunpack.c.h.b16 %v310
    %v661 = vunpack.c.l.b16 %v311
    %v662 = vunpack.c.h.b16 %v311
    %v663 = vunpack.c.l.b16 %v312
    %v664 = vunpack.c.h.b16 %v312
    %v665 = vunpack.c.l.b16 %v313
    %v666 = vunpack.c.h.b16 %v313
    %v667 = vunpack.c.l.b16 %v314
    %v668 = vunpack.c.h.b16 %v314
    %v669 = vunpack.c.l.b16 %v315
    %v670 = vunpack.c.h.b16 %v315
    %v671 = vunpack.c.l.b16 %v316
    %v672 = vunpack.c.h.b16 %v316
    %v673 = vunpack.c.l.b16 %v317
    %v674 = vunpack.c.h.b16 %v317
    %v675 = vunpack.c.l.b16 %v318
    %v676 = vunpack.c.h.b16 %v318
    %v677 = vunpack.c.l.b16 %v319
    %v678 = vunpack.c.h.b16 %v319
    %v679 = vunpack.c.l.b16 %v320
    %v680 = vunpack.c.h.b16 %v320
    %v681 = vunpack.c.l.b16 %v321
    %v682 = vunpack.c.h.b16 %v321
    %v683 = vunpack.c.l.b16 %v322
    %v684 = vunpack.c.h.b16 %v322
    %v685 = vunpack.c.l.b16 %v323
    %v686 = vunpack.c.h.b16 %v323
    %v687 = vunpack.c.l.b16 %v324
    %v688 = vunpack.c.h.b16 %v324
    %v689 = vunpack.c.l.b16 %v325
    %v690 = vunpack.c.h.b16 %v325
    %v691 = vunpack.c.l.b16 %v326
    %v692 = vunpack.c.h.b16 %v326
    %v693 = vunpack.c.l.b16 %v327
    %v694 = vunpack.c.h.b16 %v327
    %v695 = vunpack.c.l.b16 %v328
    %v696 = vunpack.c.h.b16 %v328
    %v697 = vunpack.c.l.b16 %v329
    %v698 = vunpack.c.h.b16 %v329
    %v699 = vunpack.c.l.b16 %v330
    %v700 = vunpack.c.h.b16 %v330
    %v701 = vunpack.c.l.b16 %v331
    %v702 = vunpack.c.h.b16 %v331
    %v703 = vunpack.c.l.b16 %v332
    %v704 = vunpack.c.h.b16 %v332
    %v705 = vunpack.c.l.b16 %v333
    %v706 = vunpack.c.h.b16 %v333
    %v707 = vunpack.c.l.b16 %v334
    %v708 = vunpack.c.h.b16 %v334
    %v709 = vunpack.c.l.b16 %v335
    %v710 = vunpack.c.h.b16 %v335
    %v711 = vunpack.c.l.b16 %v336
    %v712 = vunpack.c.h.b16 %v336
    %v713 = vunpack.c.l.b16 %v337
    %v714 = vunpack.c.h.b16 %v337
    %v715 = vunpack.c.l.b16 %v338
    %v716 = vunpack.c.h.b16 %v338
    %v717 = vunpack.c.l.b16 %v339
    %v718 = vunpack.c.h.b16 %v339
    %v719 = vunpack.c.l.b16 %v340
    %v720 = vunpack.c.h.b16 %v340
    %v721 = vunpack.c.l.b16 %v341
    %v722 = vunpack.c.h.b16 %v341
    %v723 = vunpack.c.l.b16 %v342
    %v724 = vunpack.c.h.b16 %v342
    %v725 = vunpack.c.l.b16 %v343
    %v726 = vunpack.c.h.b16 %v343
    %v727 = vunpack.c.l.b16 %v344
    %v728 = vunpack.c.h.b16 %v344
    %v729 = vunpack.c.l.b16 %v345
    %v730 = vunpack.c.h.b16 %v345
    %v731 = vunpack.c.l.b16 %v346
    %v732 = vunpack.c.h.b16 %v346
    %v733 = vunpack.c.l.b16 %v347
    %v734 = vunpack.c.h.b16 %v347
    %v735 = vunpack.c.l.b16 %v348
    %v736 = vunpack.c.h.b16 %v348
    %v737 = vunpack.c.l.b16 %v349
    %v738 = vunpack.c.h.b16 %v349
    %v739 = vunpack.c.l.b16 %v350
    %v740 = vunpack.c.h.b16 %v350
    %v741 = vunpack.c.l.b16 %v351
    %v742 = vunpack.c.h.b16 %v351
    %v743 = vunpack.c.l.b16 %v352
    %v744 = vunpack.c.h.b16 %v352
    %v745 = vunpack.c.l.b16 %v353
    %v746 = vunpack.c.h.b16 %v353
    %v747 = vunpack.c.l.b16 %v354
    %v748 = vunpack.c.h.b16 %v354
    %v749 = vunpack.c.l.b16 %v355
    %v750 = vunpack.c.h.b16 %v355
    %v751 = vunpack.c.l.b16 %v356
    %v752 = vunpack.c.h.b16 %v356
    %v753 = vunpack.c.l.b16 %v357
    %v754 = vunpack.c.h.b16 %v357
    %v755 = vunpack.c.l.b16 %v358
    %v756 = vunpack.c.h.b16 %v358
    %v757 = vunpack.c.l.b16 %v359
    %v758 = vunpack.c.h.b16 %v359
    %v759 = vunpack.c.l.b16 %v360
    %v760 = vunpack.c.h.b16 %v360
    %v761 = vunpack.c.l.b16 %v361
    %v762 = vunpack.c.h.b16 %v361
    %v763 = vunpack.c.l.b16 %v362
    %v764 = vunpack.c.h.b16 %v362
    %v765 = vunpack.c.l.b16 %v363
    %v766 = vunpack.c.h.b16 %v363
    %v767 = vunpack.c.l.b16 %v364
    %v768 = vunpack.c.h.b16 %v364
    %v769 = vunpack.c.l.b16 %v365
    %v770 = vunpack.c.h.b16 %v365
    %v771 = vunpack.c.l.b16 %v366
    %v772 = vunpack.c.h.b16 %v366
    %v773 = vpack.c.b16 %v521, %v517
    %v774 = vpack.c.b16 %v522, %v518
    %v775 = vpack.c.b16 %v523, %v519
    %v776 = vpack.c.b16 %v524, %v520
    %v777 = vpack.c.b16 %v529, %v525
    %v778 = vpack.c.b16 %v530, %v526
    %v779 = vpack.c.b16 %v531, %v527
    %v780 = vpack.c.b16 %v532, %v528
    %v781 = vpack.c.b16 %v537, %v533
    %v782 = vpack.c.b16 %v538, %v534
    %v783 = vpack.c.b16 %v539, %v535
    %v784 = vpack.c.b16 %v540, %v536
    %v785 = vpack.c.b16 %v545, %v541
    %v786 = vpack.c.b16 %v546, %v542
    %v787 = vpack.c.b16 %v547, %v543
    %v788 = vpack.c.b16 %v548, %v544
    %v789 = vpack.c.b16 %v553, %v549
    %v790 = vpack.c.b16 %v554, %v550
    %v791 = vpack.c.b16 %v555, %v551
    %v792 = vpack.c.b16 %v556, %v552
    %v793 = vpack.c.b16 %v561, %v557
    %v794 = vpack.c.b16 %v562, %v558
    %v795 = vpack.c.b16 %v563, %v559
    %v796 = vpack.c.b16 %v564, %v560
    %v797 = vpack.c.b16 %v569, %v565
    %v798 = vpack.c.b16 %v570, %v566
    %v799 = vpack.c.b16 %v571, %v567
    %v800 = vpack.c.b16 %v572, %v568
    %v801 = vpack.c.b16 %v577, %v573
    %v802 = vpack.c.b16 %v578, %v574
    %v803 = vpack.c.b16 %v579, %v575
    %v804 = vpack.c.b16 %v580, %v576
    %v805 = vpack.c.b16 %v585, %v581
    %v806 = vpack.c.b16 %v586, %v582
    %v807 = vpack.c.b16 %v587, %v583
    %v808 = vpack.c.b16 %v588, %v584
    %v809 = vpack.c.b16 %v593, %v589
    %v810 = vpack.c.b16 %v594, %v590
    %v811 = vpack.c.b16 %v595, %v591
    %v812 = vpack.c.b16 %v596, %v592
    %v813 = vpack.c.b16 %v601, %v597
    %v814 = vpack.c.b16 %v602, %v598
    %v815 = vpack.c.b16 %v603, %v599
    %v816 = vpack.c.b16 %v604, %v600
    %v817 = vpack.c.b16 %v609, %v605
    %v818 = vpack.c.b16 %v610, %v606
    %v819 = vpack.c.b16 %v611, %v607
    %v820 = vpack.c.b16 %v612, %v608
    %v821 = vpack.c.b16 %v617, %v613
    %v822 = vpack.c.b16 %v618, %v614
    %v823 = vpack.c.b16 %v619, %v615
    %v824 = vpack.c.b16 %v620, %v616
    %v825 = vpack.c.b16 %v625, %v621
    %v826 = vpack.c.b16 %v626, %v622
    %v827 = vpack.c.b16 %v627, %v623
    %v828 = vpack.c.b16 %v628, %v624
    %v829 = vpack.c.b16 %v633, %v629
    %v830 = vpack.c.b16 %v634, %v630
    %v831 = vpack.c.b16 %v635, %v631
    %v832 = vpack.c.b16 %v636, %v632
    %v833 = vpack.c.b16 %v641, %v637
    %v834 = vpack.c.b16 %v642, %v638
    %v835 = vpack.c.b16 %v643, %v639
    %v836 = vpack.c.b16 %v644, %v640
    %v837 = vpack.c.b16 %v649, %v645
    %v838 = vpack.c.b16 %v650, %v646
    %v839 = vpack.c.b16 %v651, %v647
    %v840 = vpack.c.b16 %v652, %v648
    %v841 = vpack.c.b16 %v657, %v653
    %v842 = vpack.c.b16 %v658, %v654
    %v843 = vpack.c.b16 %v659, %v655
    %v844 = vpack.c.b16 %v660, %v656
    %v845 = vpack.c.b16 %v665, %v661
    %v846 = vpack.c.b16 %v666, %v662
    %v847 = vpack.c.b16 %v667, %v663
    %v848 = vpack.c.b16 %v668, %v664
    %v849 = vpack.c.b16 %v673, %v669
    %v850 = vpack.c.b16 %v674, %v670
    %v851 = vpack.c.b16 %v675, %v671
    %v852 = vpack.c.b16 %v676, %v672
    %v853 = vpack.c.b16 %v681, %v677
    %v854 = vpack.c.b16 %v682, %v678
    %v855 = vpack.c.b16 %v683, %v679
    %v856 = vpack.c.b16 %v684, %v680
    %v857 = vpack.c.b16 %v689, %v685
    %v858 = vpack.c.b16 %v690, %v686
    %v859 = vpack.c.b16 %v691, %v687
    %v860 = vpack.c.b16 %v692, %v688
    %v861 = vpack.c.b16 %v697, %v693
    %v862 = vpack.c.b16 %v698, %v694
    %v863 = vpack.c.b16 %v699, %v695
    %v864 = vpack.c.b16 %v700, %v696
    %v865 = vpack.c.b16 %v705, %v701
    %v866 = vpack.c.b16 %v706, %v702
    %v867 = vpack.c.b16 %v707, %v703
    %v868 = vpack.c.b16 %v708, %v704
    %v869 = vpack.c.b16 %v713, %v709
    %v870 = vpack.c.b16 %v714, %v710
    %v871 = vpack.c.b16 %v715, %v711
    %v872 = vpack.c.b16 %v716, %v712
    %v873 = vpack.c.b16 %v721, %v717
    %v874 = vpack.c.b16 %v722, %v718
    %v875 = vpack.c.b16 %v723, %v719
    %v876 = vpack.c.b16 %v724, %v720
    %v877 = vpack.c.b16 %v729, %v725
    %v878 = vpack.c.b16 %v730, %v726
    %v879 = vpack.c.b16 %v731, %v727
    %v880 = vpack.c.b16 %v732, %v728
    %v881 = vpack.c.b16 %v737, %v733
    %v882 = vpack.c.b16 %v738, %v734
    %v883 = vpack.c.b16 %v739, %v735
    %v884 = vpack.c.b16 %v740, %v736
    %v885 = vpack.c.b16 %v745, %v741
    %v886 = vpack.c.b16 %v746, %v742
    %v887 = vpack.c.b16 %v747, %v743
    %v888 = vpack.c.b16 %v748, %v744
    %v889 = vpack.c.b16 %v753, %v749
    %v890 = vpack.c.b16 %v754, %v750
    %v891 = vpack.c.b16 %v755, %v751
    %v892 = vpack.c.b16 %v756, %v752
    %v893 = vpack.c.b16 %v761, %v757
    %v894 = vpack.c.b16 %v762, %v758
    %v895 = vpack.c.b16 %v763, %v759
    %v896 = vpack.c.b16 %v764, %v760
    %v897 = vpack.c.b16 %v769, %v765
    %v898 = vpack.c.b16 %v770, %v766
    %v899 = vpack.c.b16 %v771, %v767
    %v900 = vpack.c.b16 %v772, %v768
    %1029 = vmatprep.subr.bf16.mxu0 %v802
    %1030 = vmatpush1.bf16.msra.mxu0 %v801
    %1031 = vmatprep.subr.bf16.mxu0 %v798
    %1032 = vmatpush1.bf16.msra.mxu0 %v797
    %1033 = vmatprep.subr.bf16.mxu0 %v794
    %1034 = vmatpush1.bf16.msra.mxu0 %v793
    %1035 = vmatprep.subr.bf16.mxu0 %v790
    %1036 = vmatpush1.bf16.msra.mxu0 %v789
    %1037 = vmatprep.subr.bf16.mxu0 %v786
    %1038 = vmatpush1.bf16.msra.mxu0 %v785
    %1039 = vmatprep.subr.bf16.mxu0 %v782
    %1040 = vmatpush1.bf16.msra.mxu0 %v781
    %1041 = vmatprep.subr.bf16.mxu0 %v778
    %1042 = vmatpush1.bf16.msra.mxu0 %v777
    %1043 = vmatprep.subr.bf16.mxu0 %v774
    %1044 = vmatpush1.bf16.msra.mxu0 %v773
    %1045 = vmatprep.subr.bf16.mxu0 %v834
    %1046 = vmatpush2.bf16.msra.mxu0 %v833
    %1047 = vmatprep.subr.bf16.mxu0 %v830
    %1048 = vmatpush2.bf16.msra.mxu0 %v829
    %1049 = vmatprep.subr.bf16.mxu0 %v826
    %1050 = vmatpush2.bf16.msra.mxu0 %v825
    %1051 = vmatprep.subr.bf16.mxu0 %v822
    %1052 = vmatpush2.bf16.msra.mxu0 %v821
    %1053 = vmatprep.subr.bf16.mxu0 %v818
    %1054 = vmatpush2.bf16.msra.mxu0 %v817
    %1055 = vmatprep.subr.bf16.mxu0 %v814
    %1056 = vmatpush2.bf16.msra.mxu0 %v813
    %1057 = vmatprep.subr.bf16.mxu0 %v810
    %1058 = vmatpush2.bf16.msra.mxu0 %v809
    %1059 = vmatprep.subr.bf16.mxu0 %v806
    %1060 = vmatpush2.bf16.msra.mxu0 %v805
    %1061 = vmatprep.mubr.bf16.mxu0 %v236
    %1062 = vmatmul.mubr.bf16.gmra.mxu0 %v235
    %v1063 = vpop.f32.mrf.mxu0
    %v1064 = vadd.f32 %v372, %v1063
    %v1065 = vpop.f32.mrf.mxu0
    %v1066 = vadd.f32 %v376, %v1065
    %v1067 = vpop.f32.mrf.mxu0
    %v1068 = vpop.f32.mrf.mxu0
    %1069 = vdwg.mxu0
    %1070 = vmatprep.subr.bf16.mxu0 %v866
    %1071 = vmatpush1.bf16.msra.mxu0 %v865
    %1072 = vmatprep.subr.bf16.mxu0 %v862
    %1073 = vmatpush1.bf16.msra.mxu0 %v861
    %1074 = vmatprep.subr.bf16.mxu0 %v858
    %1075 = vmatpush1.bf16.msra.mxu0 %v857
    %1076 = vmatprep.subr.bf16.mxu0 %v854
    %1077 = vmatpush1.bf16.msra.mxu0 %v853
    %1078 = vmatprep.subr.bf16.mxu0 %v850
    %1079 = vmatpush1.bf16.msra.mxu0 %v849
    %1080 = vmatprep.subr.bf16.mxu0 %v846
    %1081 = vmatpush1.bf16.msra.mxu0 %v845
    %1082 = vmatprep.subr.bf16.mxu0 %v842
    %1083 = vmatpush1.bf16.msra.mxu0 %v841
    %1084 = vmatprep.subr.bf16.mxu0 %v838
    %1085 = vmatpush1.bf16.msra.mxu0 %v837
    %1086 = vmatprep.subr.bf16.mxu0 %v898
    %1087 = vmatpush2.bf16.msra.mxu0 %v897
    %1088 = vmatprep.subr.bf16.mxu0 %v894
    %1089 = vmatpush2.bf16.msra.mxu0 %v893
    %1090 = vmatprep.subr.bf16.mxu0 %v890
    %1091 = vmatpush2.bf16.msra.mxu0 %v889
    %1092 = vmatprep.subr.bf16.mxu0 %v886
    %1093 = vmatpush2.bf16.msra.mxu0 %v885
    %1094 = vmatprep.subr.bf16.mxu0 %v882
    %1095 = vmatpush2.bf16.msra.mxu0 %v881
    %1096 = vmatprep.subr.bf16.mxu0 %v878
    %1097 = vmatpush2.bf16.msra.mxu0 %v877
    %1098 = vmatprep.subr.bf16.mxu0 %v874
    %1099 = vmatpush2.bf16.msra.mxu0 %v873
    %1100 = vmatprep.subr.bf16.mxu0 %v870
    %1101 = vmatpush2.bf16.msra.mxu0 %v869
    %1102 = vmatprep.mubr.bf16.mxu0 %v238
    %1103 = vmatmul.mubr.bf16.gmra.mxu0 %v237
    %v1104 = vpop.f32.mrf.mxu0
    %v1105 = vadd.f32 %v1064, %v1104
    %v1106 = vpop.f32.mrf.mxu0
    %v1107 = vadd.f32 %v1066, %v1106
    %v1108 = vpop.f32.mrf.mxu0
    %v1109 = vpop.f32.mrf.mxu0
    %1110 = vdwg.mxu0
    %1111 = vmatprep.subr.bf16.mxu0 %v804
    %1112 = vmatpush1.bf16.msra.mxu0 %v803
    %1113 = vmatprep.subr.bf16.mxu0 %v800
    %1114 = vmatpush1.bf16.msra.mxu0 %v799
    %1115 = vmatprep.subr.bf16.mxu0 %v796
    %1116 = vmatpush1.bf16.msra.mxu0 %v795
    %1117 = vmatprep.subr.bf16.mxu0 %v792
    %1118 = vmatpush1.bf16.msra.mxu0 %v791
    %1119 = vmatprep.subr.bf16.mxu0 %v788
    %1120 = vmatpush1.bf16.msra.mxu0 %v787
    %1121 = vmatprep.subr.bf16.mxu0 %v784
    %1122 = vmatpush1.bf16.msra.mxu0 %v783
    %1123 = vmatprep.subr.bf16.mxu0 %v780
    %1124 = vmatpush1.bf16.msra.mxu0 %v779
    %1125 = vmatprep.subr.bf16.mxu0 %v776
    %1126 = vmatpush1.bf16.msra.mxu0 %v775
    %1127 = vmatprep.subr.bf16.mxu0 %v836
    %1128 = vmatpush2.bf16.msra.mxu0 %v835
    %1129 = vmatprep.subr.bf16.mxu0 %v832
    %1130 = vmatpush2.bf16.msra.mxu0 %v831
    %1131 = vmatprep.subr.bf16.mxu0 %v828
    %1132 = vmatpush2.bf16.msra.mxu0 %v827
    %1133 = vmatprep.subr.bf16.mxu0 %v824
    %1134 = vmatpush2.bf16.msra.mxu0 %v823
    %1135 = vmatprep.subr.bf16.mxu0 %v820
    %1136 = vmatpush2.bf16.msra.mxu0 %v819
    %1137 = vmatprep.subr.bf16.mxu0 %v816
    %1138 = vmatpush2.bf16.msra.mxu0 %v815
    %1139 = vmatprep.subr.bf16.mxu0 %v812
    %1140 = vmatpush2.bf16.msra.mxu0 %v811
    %1141 = vmatprep.subr.bf16.mxu0 %v808
    %1142 = vmatpush2.bf16.msra.mxu0 %v807
    %1143 = vmatprep.mubr.bf16.mxu0 %v236
    %1144 = vmatmul.mubr.bf16.gmra.mxu0 %v235
    %v1145 = vpop.f32.mrf.mxu0
    %v1146 = vadd.f32 %v380, %v1145
    %v1147 = vpop.f32.mrf.mxu0
    %v1148 = vadd.f32 %v384, %v1147
    %v1149 = vpop.f32.mrf.mxu0
    %v1150 = vpop.f32.mrf.mxu0
    %1151 = vdwg.mxu0
    %1152 = vmatprep.subr.bf16.mxu0 %v868
    %1153 = vmatpush1.bf16.msra.mxu0 %v867
    %1154 = vmatprep.subr.bf16.mxu0 %v864
    %1155 = vmatpush1.bf16.msra.mxu0 %v863
    %1156 = vmatprep.subr.bf16.mxu0 %v860
    %1157 = vmatpush1.bf16.msra.mxu0 %v859
    %1158 = vmatprep.subr.bf16.mxu0 %v856
    %1159 = vmatpush1.bf16.msra.mxu0 %v855
    %1160 = vmatprep.subr.bf16.mxu0 %v852
    %1161 = vmatpush1.bf16.msra.mxu0 %v851
    %1162 = vmatprep.subr.bf16.mxu0 %v848
    %1163 = vmatpush1.bf16.msra.mxu0 %v847
    %1164 = vmatprep.subr.bf16.mxu0 %v844
    %1165 = vmatpush1.bf16.msra.mxu0 %v843
    %1166 = vmatprep.subr.bf16.mxu0 %v840
    %1167 = vmatpush1.bf16.msra.mxu0 %v839
    %1168 = vmatprep.subr.bf16.mxu0 %v900
    %1169 = vmatpush2.bf16.msra.mxu0 %v899
    %1170 = vmatprep.subr.bf16.mxu0 %v896
    %1171 = vmatpush2.bf16.msra.mxu0 %v895
    %1172 = vmatprep.subr.bf16.mxu0 %v892
    %1173 = vmatpush2.bf16.msra.mxu0 %v891
    %1174 = vmatprep.subr.bf16.mxu0 %v888
    %1175 = vmatpush2.bf16.msra.mxu0 %v887
    %1176 = vmatprep.subr.bf16.mxu0 %v884
    %1177 = vmatpush2.bf16.msra.mxu0 %v883
    %1178 = vmatprep.subr.bf16.mxu0 %v880
    %1179 = vmatpush2.bf16.msra.mxu0 %v879
    %1180 = vmatprep.subr.bf16.mxu0 %v876
    %1181 = vmatpush2.bf16.msra.mxu0 %v875
    %1182 = vmatprep.subr.bf16.mxu0 %v872
    %1183 = vmatpush2.bf16.msra.mxu0 %v871
    %1184 = vmatprep.mubr.bf16.mxu0 %v238
    %1185 = vmatmul.mubr.bf16.gmra.mxu0 %v237
    %v1186 = vpop.f32.mrf.mxu0
    %v1187 = vadd.f32 %v1146, %v1186
    %v1188 = vpop.f32.mrf.mxu0
    %v1189 = vadd.f32 %v1148, %v1188
    %v1190 = vpop.f32.mrf.mxu0
    %v1191 = vpop.f32.mrf.mxu0
    %1192 = vdwg.mxu0
    %v1193 = vmax.f32 %v1105, 0.0
    %v1194 = vmax.f32 %v1107, 0.0
    %v1195 = vmax.f32 %v1187, 0.0
    %v1196 = vmax.f32 %v1189, 0.0
    %v1197 = vpack.c.bf16 %v1193, %v1193
    %v1198 = vpack.c.bf16 %v1194, %v1194
    %v1199 = vpack.c.bf16 %v1195, %v1195
    %v1200 = vpack.c.bf16 %v1196, %v1196
    %v1201 = vld [vmem:[#allocation8] sm:$0xff]
    %v1202 = vld [vmem:[#allocation8 + $0x8] sm:$0xff]
    %v1203 = vld [vmem:[#allocation8 + $0x10] sm:$0xff]
    %v1204 = vld [vmem:[#allocation8 + $0x18] sm:$0xff]
    %v1205 = vld [vmem:[#allocation8 + $0x20] sm:$0xff]
    %v1206 = vld [vmem:[#allocation8 + $0x28] sm:$0xff]
    %v1207 = vld [vmem:[#allocation8 + $0x30] sm:$0xff]
    %v1208 = vld [vmem:[#allocation8 + $0x38] sm:$0xff]
    %v1209 = vld [vmem:[#allocation8 + $0x40] sm:$0xff]
    %v1210 = vld [vmem:[#allocation8 + $0x48] sm:$0xff]
    %v1211 = vld [vmem:[#allocation8 + $0x50] sm:$0xff]
    %v1212 = vld [vmem:[#allocation8 + $0x58] sm:$0xff]
    %v1213 = vld [vmem:[#allocation8 + $0x60] sm:$0xff]
    %v1214 = vld [vmem:[#allocation8 + $0x68] sm:$0xff]
    %v1215 = vld [vmem:[#allocation8 + $0x70] sm:$0xff]
    %v1216 = vld [vmem:[#allocation8 + $0x78] sm:$0xff]
    %v1217 = vld [vmem:[#allocation8 + $0x80] sm:$0xff]
    %v1218 = vld [vmem:[#allocation8 + $0x88] sm:$0xff]
    %v1219 = vld [vmem:[#allocation8 + $0x90] sm:$0xff]
    %v1220 = vld [vmem:[#allocation8 + $0x98] sm:$0xff]
    %v1221 = vld [vmem:[#allocation8 + $0xa0] sm:$0xff]
    %v1222 = vld [vmem:[#allocation8 + $0xa8] sm:$0xff]
    %v1223 = vld [vmem:[#allocation8 + $0xb0] sm:$0xff]
    %v1224 = vld [vmem:[#allocation8 + $0xb8] sm:$0xff]
    %v1225 = vld [vmem:[#allocation8 + $0xc0] sm:$0xff]
    %v1226 = vld [vmem:[#allocation8 + $0xc8] sm:$0xff]
    %v1227 = vld [vmem:[#allocation8 + $0xd0] sm:$0xff]
    %v1228 = vld [vmem:[#allocation8 + $0xd8] sm:$0xff]
    %v1229 = vld [vmem:[#allocation8 + $0xe0] sm:$0xff]
    %v1230 = vld [vmem:[#allocation8 + $0xe8] sm:$0xff]
    %v1231 = vld [vmem:[#allocation8 + $0xf0] sm:$0xff]
    %v1232 = vld [vmem:[#allocation8 + $0xf8] sm:$0xff]
    %v1233 = vld [vmem:[#allocation8 + $0x100] sm:$0xff]
    %v1234 = vld [vmem:[#allocation8 + $0x108] sm:$0xff]
    %v1235 = vld [vmem:[#allocation8 + $0x110] sm:$0xff]
    %v1236 = vld [vmem:[#allocation8 + $0x118] sm:$0xff]
    %v1237 = vld [vmem:[#allocation8 + $0x120] sm:$0xff]
    %v1238 = vld [vmem:[#allocation8 + $0x128] sm:$0xff]
    %v1239 = vld [vmem:[#allocation8 + $0x130] sm:$0xff]
    %v1240 = vld [vmem:[#allocation8 + $0x138] sm:$0xff]
    %v1241 = vld [vmem:[#allocation8 + $0x140] sm:$0xff]
    %v1242 = vld [vmem:[#allocation8 + $0x148] sm:$0xff]
    %v1243 = vld [vmem:[#allocation8 + $0x150] sm:$0xff]
    %v1244 = vld [vmem:[#allocation8 + $0x158] sm:$0xff]
    %v1245 = vld [vmem:[#allocation8 + $0x160] sm:$0xff]
    %v1246 = vld [vmem:[#allocation8 + $0x168] sm:$0xff]
    %v1247 = vld [vmem:[#allocation8 + $0x170] sm:$0xff]
    %v1248 = vld [vmem:[#allocation8 + $0x178] sm:$0xff]
    %v1249 = vld [vmem:[#allocation8 + $0x180] sm:$0xff]
    %v1250 = vld [vmem:[#allocation8 + $0x188] sm:$0xff]
    %v1251 = vld [vmem:[#allocation8 + $0x190] sm:$0xff]
    %v1252 = vld [vmem:[#allocation8 + $0x198] sm:$0xff]
    %v1253 = vld [vmem:[#allocation8 + $0x1a0] sm:$0xff]
    %v1254 = vld [vmem:[#allocation8 + $0x1a8] sm:$0xff]
    %v1255 = vld [vmem:[#allocation8 + $0x1b0] sm:$0xff]
    %v1256 = vld [vmem:[#allocation8 + $0x1b8] sm:$0xff]
    %v1257 = vld [vmem:[#allocation8 + $0x1c0] sm:$0xff]
    %v1258 = vld [vmem:[#allocation8 + $0x1c8] sm:$0xff]
    %v1259 = vld [vmem:[#allocation8 + $0x1d0] sm:$0xff]
    %v1260 = vld [vmem:[#allocation8 + $0x1d8] sm:$0xff]
    %v1261 = vld [vmem:[#allocation8 + $0x1e0] sm:$0xff]
    %v1262 = vld [vmem:[#allocation8 + $0x1e8] sm:$0xff]
    %v1263 = vld [vmem:[#allocation8 + $0x1f0] sm:$0xff]
    %v1264 = vld [vmem:[#allocation8 + $0x1f8] sm:$0xff]
    %v1265 = vld [vmem:[#allocation8 + $0x200] sm:$0xff]
    %v1266 = vld [vmem:[#allocation8 + $0x208] sm:$0xff]
    %v1267 = vld [vmem:[#allocation8 + $0x210] sm:$0xff]
    %v1268 = vld [vmem:[#allocation8 + $0x218] sm:$0xff]
    %v1269 = vld [vmem:[#allocation8 + $0x220] sm:$0xff]
    %v1270 = vld [vmem:[#allocation8 + $0x228] sm:$0xff]
    %v1271 = vld [vmem:[#allocation8 + $0x230] sm:$0xff]
    %v1272 = vld [vmem:[#allocation8 + $0x238] sm:$0xff]
    %v1273 = vld [vmem:[#allocation8 + $0x240] sm:$0xff]
    %v1274 = vld [vmem:[#allocation8 + $0x248] sm:$0xff]
    %v1275 = vld [vmem:[#allocation8 + $0x250] sm:$0xff]
    %v1276 = vld [vmem:[#allocation8 + $0x258] sm:$0xff]
    %v1277 = vld [vmem:[#allocation8 + $0x260] sm:$0xff]
    %v1278 = vld [vmem:[#allocation8 + $0x268] sm:$0xff]
    %v1279 = vld [vmem:[#allocation8 + $0x270] sm:$0xff]
    %v1280 = vld [vmem:[#allocation8 + $0x278] sm:$0xff]
    %v1281 = vld [vmem:[#allocation8 + $0x280] sm:$0xff]
    %v1282 = vld [vmem:[#allocation8 + $0x288] sm:$0xff]
    %v1283 = vld [vmem:[#allocation8 + $0x290] sm:$0xff]
    %v1284 = vld [vmem:[#allocation8 + $0x298] sm:$0xff]
    %v1285 = vld [vmem:[#allocation8 + $0x2a0] sm:$0xff]
    %v1286 = vld [vmem:[#allocation8 + $0x2a8] sm:$0xff]
    %v1287 = vld [vmem:[#allocation8 + $0x2b0] sm:$0xff]
    %v1288 = vld [vmem:[#allocation8 + $0x2b8] sm:$0xff]
    %v1289 = vld [vmem:[#allocation8 + $0x2c0] sm:$0xff]
    %v1290 = vld [vmem:[#allocation8 + $0x2c8] sm:$0xff]
    %v1291 = vld [vmem:[#allocation8 + $0x2d0] sm:$0xff]
    %v1292 = vld [vmem:[#allocation8 + $0x2d8] sm:$0xff]
    %v1293 = vld [vmem:[#allocation8 + $0x2e0] sm:$0xff]
    %v1294 = vld [vmem:[#allocation8 + $0x2e8] sm:$0xff]
    %v1295 = vld [vmem:[#allocation8 + $0x2f0] sm:$0xff]
    %v1296 = vld [vmem:[#allocation8 + $0x2f8] sm:$0xff]
    %v1297 = vld [vmem:[#allocation8 + $0x300] sm:$0xff]
    %v1298 = vld [vmem:[#allocation8 + $0x308] sm:$0xff]
    %v1299 = vld [vmem:[#allocation8 + $0x310] sm:$0xff]
    %v1300 = vld [vmem:[#allocation8 + $0x318] sm:$0xff]
    %v1301 = vld [vmem:[#allocation8 + $0x320] sm:$0xff]
    %v1302 = vld [vmem:[#allocation8 + $0x328] sm:$0xff]
    %v1303 = vld [vmem:[#allocation8 + $0x330] sm:$0xff]
    %v1304 = vld [vmem:[#allocation8 + $0x338] sm:$0xff]
    %v1305 = vld [vmem:[#allocation8 + $0x340] sm:$0xff]
    %v1306 = vld [vmem:[#allocation8 + $0x348] sm:$0xff]
    %v1307 = vld [vmem:[#allocation8 + $0x350] sm:$0xff]
    %v1308 = vld [vmem:[#allocation8 + $0x358] sm:$0xff]
    %v1309 = vld [vmem:[#allocation8 + $0x360] sm:$0xff]
    %v1310 = vld [vmem:[#allocation8 + $0x368] sm:$0xff]
    %v1311 = vld [vmem:[#allocation8 + $0x370] sm:$0xff]
    %v1312 = vld [vmem:[#allocation8 + $0x378] sm:$0xff]
    %v1313 = vld [vmem:[#allocation8 + $0x380] sm:$0xff]
    %v1314 = vld [vmem:[#allocation8 + $0x388] sm:$0xff]
    %v1315 = vld [vmem:[#allocation8 + $0x390] sm:$0xff]
    %v1316 = vld [vmem:[#allocation8 + $0x398] sm:$0xff]
    %v1317 = vld [vmem:[#allocation8 + $0x3a0] sm:$0xff]
    %v1318 = vld [vmem:[#allocation8 + $0x3a8] sm:$0xff]
    %v1319 = vld [vmem:[#allocation8 + $0x3b0] sm:$0xff]
    %v1320 = vld [vmem:[#allocation8 + $0x3b8] sm:$0xff]
    %v1321 = vld [vmem:[#allocation8 + $0x3c0] sm:$0xff]
    %v1322 = vld [vmem:[#allocation8 + $0x3c8] sm:$0xff]
    %v1323 = vld [vmem:[#allocation8 + $0x3d0] sm:$0xff]
    %v1324 = vld [vmem:[#allocation8 + $0x3d8] sm:$0xff]
    %v1325 = vld [vmem:[#allocation8 + $0x3e0] sm:$0xff]
    %v1326 = vld [vmem:[#allocation8 + $0x3e8] sm:$0xff]
    %v1327 = vld [vmem:[#allocation8 + $0x3f0] sm:$0xff]
    %v1328 = vld [vmem:[#allocation8 + $0x3f8] sm:$0xff]
    %v1329 = vld [vmem:[%s6] sm:$0xf]
    %v1331 = vlaneseq
    %v1332 = vshrl.u32 %v1331, 7
    %v1333 = vsub.s32 0, %v1332
    %v1334 = vrot.slane %v1329, %v1333
    %v1335 = vlaneseq
    %v1336 = vshrl.u32 %v1335, 7
    %v1337 = vsub.s32 1, %v1336
    %v1338 = vrot.slane %v1329, %v1337
    %v1339 = vlaneseq
    %v1340 = vshrl.u32 %v1339, 7
    %v1341 = vsub.s32 2, %v1340
    %v1342 = vrot.slane %v1329, %v1341
    %v1343 = vlaneseq
    %v1344 = vshrl.u32 %v1343, 7
    %v1345 = vsub.s32 3, %v1344
    %v1346 = vrot.slane %v1329, %v1345
    %v1479 = vunpack.c.l.b16 %v1201
    %v1480 = vunpack.c.h.b16 %v1201
    %v1481 = vunpack.c.l.b16 %v1202
    %v1482 = vunpack.c.h.b16 %v1202
    %v1483 = vunpack.c.l.b16 %v1203
    %v1484 = vunpack.c.h.b16 %v1203
    %v1485 = vunpack.c.l.b16 %v1204
    %v1486 = vunpack.c.h.b16 %v1204
    %v1487 = vunpack.c.l.b16 %v1205
    %v1488 = vunpack.c.h.b16 %v1205
    %v1489 = vunpack.c.l.b16 %v1206
    %v1490 = vunpack.c.h.b16 %v1206
    %v1491 = vunpack.c.l.b16 %v1207
    %v1492 = vunpack.c.h.b16 %v1207
    %v1493 = vunpack.c.l.b16 %v1208
    %v1494 = vunpack.c.h.b16 %v1208
    %v1495 = vunpack.c.l.b16 %v1209
    %v1496 = vunpack.c.h.b16 %v1209
    %v1497 = vunpack.c.l.b16 %v1210
    %v1498 = vunpack.c.h.b16 %v1210
    %v1499 = vunpack.c.l.b16 %v1211
    %v1500 = vunpack.c.h.b16 %v1211
    %v1501 = vunpack.c.l.b16 %v1212
    %v1502 = vunpack.c.h.b16 %v1212
    %v1503 = vunpack.c.l.b16 %v1213
    %v1504 = vunpack.c.h.b16 %v1213
    %v1505 = vunpack.c.l.b16 %v1214
    %v1506 = vunpack.c.h.b16 %v1214
    %v1507 = vunpack.c.l.b16 %v1215
    %v1508 = vunpack.c.h.b16 %v1215
    %v1509 = vunpack.c.l.b16 %v1216
    %v1510 = vunpack.c.h.b16 %v1216
    %v1511 = vunpack.c.l.b16 %v1217
    %v1512 = vunpack.c.h.b16 %v1217
    %v1513 = vunpack.c.l.b16 %v1218
    %v1514 = vunpack.c.h.b16 %v1218
    %v1515 = vunpack.c.l.b16 %v1219
    %v1516 = vunpack.c.h.b16 %v1219
    %v1517 = vunpack.c.l.b16 %v1220
    %v1518 = vunpack.c.h.b16 %v1220
    %v1519 = vunpack.c.l.b16 %v1221
    %v1520 = vunpack.c.h.b16 %v1221
    %v1521 = vunpack.c.l.b16 %v1222
    %v1522 = vunpack.c.h.b16 %v1222
    %v1523 = vunpack.c.l.b16 %v1223
    %v1524 = vunpack.c.h.b16 %v1223
    %v1525 = vunpack.c.l.b16 %v1224
    %v1526 = vunpack.c.h.b16 %v1224
    %v1527 = vunpack.c.l.b16 %v1225
    %v1528 = vunpack.c.h.b16 %v1225
    %v1529 = vunpack.c.l.b16 %v1226
    %v1530 = vunpack.c.h.b16 %v1226
    %v1531 = vunpack.c.l.b16 %v1227
    %v1532 = vunpack.c.h.b16 %v1227
    %v1533 = vunpack.c.l.b16 %v1228
    %v1534 = vunpack.c.h.b16 %v1228
    %v1535 = vunpack.c.l.b16 %v1229
    %v1536 = vunpack.c.h.b16 %v1229
    %v1537 = vunpack.c.l.b16 %v1230
    %v1538 = vunpack.c.h.b16 %v1230
    %v1539 = vunpack.c.l.b16 %v1231
    %v1540 = vunpack.c.h.b16 %v1231
    %v1541 = vunpack.c.l.b16 %v1232
    %v1542 = vunpack.c.h.b16 %v1232
    %v1543 = vunpack.c.l.b16 %v1233
    %v1544 = vunpack.c.h.b16 %v1233
    %v1545 = vunpack.c.l.b16 %v1234
    %v1546 = vunpack.c.h.b16 %v1234
    %v1547 = vunpack.c.l.b16 %v1235
    %v1548 = vunpack.c.h.b16 %v1235
    %v1549 = vunpack.c.l.b16 %v1236
    %v1550 = vunpack.c.h.b16 %v1236
    %v1551 = vunpack.c.l.b16 %v1237
    %v1552 = vunpack.c.h.b16 %v1237
    %v1553 = vunpack.c.l.b16 %v1238
    %v1554 = vunpack.c.h.b16 %v1238
    %v1555 = vunpack.c.l.b16 %v1239
    %v1556 = vunpack.c.h.b16 %v1239
    %v1557 = vunpack.c.l.b16 %v1240
    %v1558 = vunpack.c.h.b16 %v1240
    %v1559 = vunpack.c.l.b16 %v1241
    %v1560 = vunpack.c.h.b16 %v1241
    %v1561 = vunpack.c.l.b16 %v1242
    %v1562 = vunpack.c.h.b16 %v1242
    %v1563 = vunpack.c.l.b16 %v1243
    %v1564 = vunpack.c.h.b16 %v1243
    %v1565 = vunpack.c.l.b16 %v1244
    %v1566 = vunpack.c.h.b16 %v1244
    %v1567 = vunpack.c.l.b16 %v1245
    %v1568 = vunpack.c.h.b16 %v1245
    %v1569 = vunpack.c.l.b16 %v1246
    %v1570 = vunpack.c.h.b16 %v1246
    %v1571 = vunpack.c.l.b16 %v1247
    %v1572 = vunpack.c.h.b16 %v1247
    %v1573 = vunpack.c.l.b16 %v1248
    %v1574 = vunpack.c.h.b16 %v1248
    %v1575 = vunpack.c.l.b16 %v1249
    %v1576 = vunpack.c.h.b16 %v1249
    %v1577 = vunpack.c.l.b16 %v1250
    %v1578 = vunpack.c.h.b16 %v1250
    %v1579 = vunpack.c.l.b16 %v1251
    %v1580 = vunpack.c.h.b16 %v1251
    %v1581 = vunpack.c.l.b16 %v1252
    %v1582 = vunpack.c.h.b16 %v1252
    %v1583 = vunpack.c.l.b16 %v1253
    %v1584 = vunpack.c.h.b16 %v1253
    %v1585 = vunpack.c.l.b16 %v1254
    %v1586 = vunpack.c.h.b16 %v1254
    %v1587 = vunpack.c.l.b16 %v1255
    %v1588 = vunpack.c.h.b16 %v1255
    %v1589 = vunpack.c.l.b16 %v1256
    %v1590 = vunpack.c.h.b16 %v1256
    %v1591 = vunpack.c.l.b16 %v1257
    %v1592 = vunpack.c.h.b16 %v1257
    %v1593 = vunpack.c.l.b16 %v1258
    %v1594 = vunpack.c.h.b16 %v1258
    %v1595 = vunpack.c.l.b16 %v1259
    %v1596 = vunpack.c.h.b16 %v1259
    %v1597 = vunpack.c.l.b16 %v1260
    %v1598 = vunpack.c.h.b16 %v1260
    %v1599 = vunpack.c.l.b16 %v1261
    %v1600 = vunpack.c.h.b16 %v1261
    %v1601 = vunpack.c.l.b16 %v1262
    %v1602 = vunpack.c.h.b16 %v1262
    %v1603 = vunpack.c.l.b16 %v1263
    %v1604 = vunpack.c.h.b16 %v1263
    %v1605 = vunpack.c.l.b16 %v1264
    %v1606 = vunpack.c.h.b16 %v1264
    %v1607 = vunpack.c.l.b16 %v1265
    %v1608 = vunpack.c.h.b16 %v1265
    %v1609 = vunpack.c.l.b16 %v1266
    %v1610 = vunpack.c.h.b16 %v1266
    %v1611 = vunpack.c.l.b16 %v1267
    %v1612 = vunpack.c.h.b16 %v1267
    %v1613 = vunpack.c.l.b16 %v1268
    %v1614 = vunpack.c.h.b16 %v1268
    %v1615 = vunpack.c.l.b16 %v1269
    %v1616 = vunpack.c.h.b16 %v1269
    %v1617 = vunpack.c.l.b16 %v1270
    %v1618 = vunpack.c.h.b16 %v1270
    %v1619 = vunpack.c.l.b16 %v1271
    %v1620 = vunpack.c.h.b16 %v1271
    %v1621 = vunpack.c.l.b16 %v1272
    %v1622 = vunpack.c.h.b16 %v1272
    %v1623 = vunpack.c.l.b16 %v1273
    %v1624 = vunpack.c.h.b16 %v1273
    %v1625 = vunpack.c.l.b16 %v1274
    %v1626 = vunpack.c.h.b16 %v1274
    %v1627 = vunpack.c.l.b16 %v1275
    %v1628 = vunpack.c.h.b16 %v1275
    %v1629 = vunpack.c.l.b16 %v1276
    %v1630 = vunpack.c.h.b16 %v1276
    %v1631 = vunpack.c.l.b16 %v1277
    %v1632 = vunpack.c.h.b16 %v1277
    %v1633 = vunpack.c.l.b16 %v1278
    %v1634 = vunpack.c.h.b16 %v1278
    %v1635 = vunpack.c.l.b16 %v1279
    %v1636 = vunpack.c.h.b16 %v1279
    %v1637 = vunpack.c.l.b16 %v1280
    %v1638 = vunpack.c.h.b16 %v1280
    %v1639 = vunpack.c.l.b16 %v1281
    %v1640 = vunpack.c.h.b16 %v1281
    %v1641 = vunpack.c.l.b16 %v1282
    %v1642 = vunpack.c.h.b16 %v1282
    %v1643 = vunpack.c.l.b16 %v1283
    %v1644 = vunpack.c.h.b16 %v1283
    %v1645 = vunpack.c.l.b16 %v1284
    %v1646 = vunpack.c.h.b16 %v1284
    %v1647 = vunpack.c.l.b16 %v1285
    %v1648 = vunpack.c.h.b16 %v1285
    %v1649 = vunpack.c.l.b16 %v1286
    %v1650 = vunpack.c.h.b16 %v1286
    %v1651 = vunpack.c.l.b16 %v1287
    %v1652 = vunpack.c.h.b16 %v1287
    %v1653 = vunpack.c.l.b16 %v1288
    %v1654 = vunpack.c.h.b16 %v1288
    %v1655 = vunpack.c.l.b16 %v1289
    %v1656 = vunpack.c.h.b16 %v1289
    %v1657 = vunpack.c.l.b16 %v1290
    %v1658 = vunpack.c.h.b16 %v1290
    %v1659 = vunpack.c.l.b16 %v1291
    %v1660 = vunpack.c.h.b16 %v1291
    %v1661 = vunpack.c.l.b16 %v1292
    %v1662 = vunpack.c.h.b16 %v1292
    %v1663 = vunpack.c.l.b16 %v1293
    %v1664 = vunpack.c.h.b16 %v1293
    %v1665 = vunpack.c.l.b16 %v1294
    %v1666 = vunpack.c.h.b16 %v1294
    %v1667 = vunpack.c.l.b16 %v1295
    %v1668 = vunpack.c.h.b16 %v1295
    %v1669 = vunpack.c.l.b16 %v1296
    %v1670 = vunpack.c.h.b16 %v1296
    %v1671 = vunpack.c.l.b16 %v1297
    %v1672 = vunpack.c.h.b16 %v1297
    %v1673 = vunpack.c.l.b16 %v1298
    %v1674 = vunpack.c.h.b16 %v1298
    %v1675 = vunpack.c.l.b16 %v1299
    %v1676 = vunpack.c.h.b16 %v1299
    %v1677 = vunpack.c.l.b16 %v1300
    %v1678 = vunpack.c.h.b16 %v1300
    %v1679 = vunpack.c.l.b16 %v1301
    %v1680 = vunpack.c.h.b16 %v1301
    %v1681 = vunpack.c.l.b16 %v1302
    %v1682 = vunpack.c.h.b16 %v1302
    %v1683 = vunpack.c.l.b16 %v1303
    %v1684 = vunpack.c.h.b16 %v1303
    %v1685 = vunpack.c.l.b16 %v1304
    %v1686 = vunpack.c.h.b16 %v1304
    %v1687 = vunpack.c.l.b16 %v1305
    %v1688 = vunpack.c.h.b16 %v1305
    %v1689 = vunpack.c.l.b16 %v1306
    %v1690 = vunpack.c.h.b16 %v1306
    %v1691 = vunpack.c.l.b16 %v1307
    %v1692 = vunpack.c.h.b16 %v1307
    %v1693 = vunpack.c.l.b16 %v1308
    %v1694 = vunpack.c.h.b16 %v1308
    %v1695 = vunpack.c.l.b16 %v1309
    %v1696 = vunpack.c.h.b16 %v1309
    %v1697 = vunpack.c.l.b16 %v1310
    %v1698 = vunpack.c.h.b16 %v1310
    %v1699 = vunpack.c.l.b16 %v1311
    %v1700 = vunpack.c.h.b16 %v1311
    %v1701 = vunpack.c.l.b16 %v1312
    %v1702 = vunpack.c.h.b16 %v1312
    %v1703 = vunpack.c.l.b16 %v1313
    %v1704 = vunpack.c.h.b16 %v1313
    %v1705 = vunpack.c.l.b16 %v1314
    %v1706 = vunpack.c.h.b16 %v1314
    %v1707 = vunpack.c.l.b16 %v1315
    %v1708 = vunpack.c.h.b16 %v1315
    %v1709 = vunpack.c.l.b16 %v1316
    %v1710 = vunpack.c.h.b16 %v1316
    %v1711 = vunpack.c.l.b16 %v1317
    %v1712 = vunpack.c.h.b16 %v1317
    %v1713 = vunpack.c.l.b16 %v1318
    %v1714 = vunpack.c.h.b16 %v1318
    %v1715 = vunpack.c.l.b16 %v1319
    %v1716 = vunpack.c.h.b16 %v1319
    %v1717 = vunpack.c.l.b16 %v1320
    %v1718 = vunpack.c.h.b16 %v1320
    %v1719 = vunpack.c.l.b16 %v1321
    %v1720 = vunpack.c.h.b16 %v1321
    %v1721 = vunpack.c.l.b16 %v1322
    %v1722 = vunpack.c.h.b16 %v1322
    %v1723 = vunpack.c.l.b16 %v1323
    %v1724 = vunpack.c.h.b16 %v1323
    %v1725 = vunpack.c.l.b16 %v1324
    %v1726 = vunpack.c.h.b16 %v1324
    %v1727 = vunpack.c.l.b16 %v1325
    %v1728 = vunpack.c.h.b16 %v1325
    %v1729 = vunpack.c.l.b16 %v1326
    %v1730 = vunpack.c.h.b16 %v1326
    %v1731 = vunpack.c.l.b16 %v1327
    %v1732 = vunpack.c.h.b16 %v1327
    %v1733 = vunpack.c.l.b16 %v1328
    %v1734 = vunpack.c.h.b16 %v1328
    %v1735 = vpack.c.b16 %v1483, %v1479
    %v1736 = vpack.c.b16 %v1484, %v1480
    %v1737 = vpack.c.b16 %v1485, %v1481
    %v1738 = vpack.c.b16 %v1486, %v1482
    %v1739 = vpack.c.b16 %v1491, %v1487
    %v1740 = vpack.c.b16 %v1492, %v1488
    %v1741 = vpack.c.b16 %v1493, %v1489
    %v1742 = vpack.c.b16 %v1494, %v1490
    %v1743 = vpack.c.b16 %v1499, %v1495
    %v1744 = vpack.c.b16 %v1500, %v1496
    %v1745 = vpack.c.b16 %v1501, %v1497
    %v1746 = vpack.c.b16 %v1502, %v1498
    %v1747 = vpack.c.b16 %v1507, %v1503
    %v1748 = vpack.c.b16 %v1508, %v1504
    %v1749 = vpack.c.b16 %v1509, %v1505
    %v1750 = vpack.c.b16 %v1510, %v1506
    %v1751 = vpack.c.b16 %v1515, %v1511
    %v1752 = vpack.c.b16 %v1516, %v1512
    %v1753 = vpack.c.b16 %v1517, %v1513
    %v1754 = vpack.c.b16 %v1518, %v1514
    %v1755 = vpack.c.b16 %v1523, %v1519
    %v1756 = vpack.c.b16 %v1524, %v1520
    %v1757 = vpack.c.b16 %v1525, %v1521
    %v1758 = vpack.c.b16 %v1526, %v1522
    %v1759 = vpack.c.b16 %v1531, %v1527
    %v1760 = vpack.c.b16 %v1532, %v1528
    %v1761 = vpack.c.b16 %v1533, %v1529
    %v1762 = vpack.c.b16 %v1534, %v1530
    %v1763 = vpack.c.b16 %v1539, %v1535
    %v1764 = vpack.c.b16 %v1540, %v1536
    %v1765 = vpack.c.b16 %v1541, %v1537
    %v1766 = vpack.c.b16 %v1542, %v1538
    %v1767 = vpack.c.b16 %v1547, %v1543
    %v1768 = vpack.c.b16 %v1548, %v1544
    %v1769 = vpack.c.b16 %v1549, %v1545
    %v1770 = vpack.c.b16 %v1550, %v1546
    %v1771 = vpack.c.b16 %v1555, %v1551
    %v1772 = vpack.c.b16 %v1556, %v1552
    %v1773 = vpack.c.b16 %v1557, %v1553
    %v1774 = vpack.c.b16 %v1558, %v1554
    %v1775 = vpack.c.b16 %v1563, %v1559
    %v1776 = vpack.c.b16 %v1564, %v1560
    %v1777 = vpack.c.b16 %v1565, %v1561
    %v1778 = vpack.c.b16 %v1566, %v1562
    %v1779 = vpack.c.b16 %v1571, %v1567
    %v1780 = vpack.c.b16 %v1572, %v1568
    %v1781 = vpack.c.b16 %v1573, %v1569
    %v1782 = vpack.c.b16 %v1574, %v1570
    %v1783 = vpack.c.b16 %v1579, %v1575
    %v1784 = vpack.c.b16 %v1580, %v1576
    %v1785 = vpack.c.b16 %v1581, %v1577
    %v1786 = vpack.c.b16 %v1582, %v1578
    %v1787 = vpack.c.b16 %v1587, %v1583
    %v1788 = vpack.c.b16 %v1588, %v1584
    %v1789 = vpack.c.b16 %v1589, %v1585
    %v1790 = vpack.c.b16 %v1590, %v1586
    %v1791 = vpack.c.b16 %v1595, %v1591
    %v1792 = vpack.c.b16 %v1596, %v1592
    %v1793 = vpack.c.b16 %v1597, %v1593
    %v1794 = vpack.c.b16 %v1598, %v1594
    %v1795 = vpack.c.b16 %v1603, %v1599
    %v1796 = vpack.c.b16 %v1604, %v1600
    %v1797 = vpack.c.b16 %v1605, %v1601
    %v1798 = vpack.c.b16 %v1606, %v1602
    %v1799 = vpack.c.b16 %v1611, %v1607
    %v1800 = vpack.c.b16 %v1612, %v1608
    %v1801 = vpack.c.b16 %v1613, %v1609
    %v1802 = vpack.c.b16 %v1614, %v1610
    %v1803 = vpack.c.b16 %v1619, %v1615
    %v1804 = vpack.c.b16 %v1620, %v1616
    %v1805 = vpack.c.b16 %v1621, %v1617
    %v1806 = vpack.c.b16 %v1622, %v1618
    %v1807 = vpack.c.b16 %v1627, %v1623
    %v1808 = vpack.c.b16 %v1628, %v1624
    %v1809 = vpack.c.b16 %v1629, %v1625
    %v1810 = vpack.c.b16 %v1630, %v1626
    %v1811 = vpack.c.b16 %v1635, %v1631
    %v1812 = vpack.c.b16 %v1636, %v1632
    %v1813 = vpack.c.b16 %v1637, %v1633
    %v1814 = vpack.c.b16 %v1638, %v1634
    %v1815 = vpack.c.b16 %v1643, %v1639
    %v1816 = vpack.c.b16 %v1644, %v1640
    %v1817 = vpack.c.b16 %v1645, %v1641
    %v1818 = vpack.c.b16 %v1646, %v1642
    %v1819 = vpack.c.b16 %v1651, %v1647
    %v1820 = vpack.c.b16 %v1652, %v1648
    %v1821 = vpack.c.b16 %v1653, %v1649
    %v1822 = vpack.c.b16 %v1654, %v1650
    %v1823 = vpack.c.b16 %v1659, %v1655
    %v1824 = vpack.c.b16 %v1660, %v1656
    %v1825 = vpack.c.b16 %v1661, %v1657
    %v1826 = vpack.c.b16 %v1662, %v1658
    %v1827 = vpack.c.b16 %v1667, %v1663
    %v1828 = vpack.c.b16 %v1668, %v1664
    %v1829 = vpack.c.b16 %v1669, %v1665
    %v1830 = vpack.c.b16 %v1670, %v1666
    %v1831 = vpack.c.b16 %v1675, %v1671
    %v1832 = vpack.c.b16 %v1676, %v1672
    %v1833 = vpack.c.b16 %v1677, %v1673
    %v1834 = vpack.c.b16 %v1678, %v1674
    %v1835 = vpack.c.b16 %v1683, %v1679
    %v1836 = vpack.c.b16 %v1684, %v1680
    %v1837 = vpack.c.b16 %v1685, %v1681
    %v1838 = vpack.c.b16 %v1686, %v1682
    %v1839 = vpack.c.b16 %v1691, %v1687
    %v1840 = vpack.c.b16 %v1692, %v1688
    %v1841 = vpack.c.b16 %v1693, %v1689
    %v1842 = vpack.c.b16 %v1694, %v1690
    %v1843 = vpack.c.b16 %v1699, %v1695
    %v1844 = vpack.c.b16 %v1700, %v1696
    %v1845 = vpack.c.b16 %v1701, %v1697
    %v1846 = vpack.c.b16 %v1702, %v1698
    %v1847 = vpack.c.b16 %v1707, %v1703
    %v1848 = vpack.c.b16 %v1708, %v1704
    %v1849 = vpack.c.b16 %v1709, %v1705
    %v1850 = vpack.c.b16 %v1710, %v1706
    %v1851 = vpack.c.b16 %v1715, %v1711
    %v1852 = vpack.c.b16 %v1716, %v1712
    %v1853 = vpack.c.b16 %v1717, %v1713
    %v1854 = vpack.c.b16 %v1718, %v1714
    %v1855 = vpack.c.b16 %v1723, %v1719
    %v1856 = vpack.c.b16 %v1724, %v1720
    %v1857 = vpack.c.b16 %v1725, %v1721
    %v1858 = vpack.c.b16 %v1726, %v1722
    %v1859 = vpack.c.b16 %v1731, %v1727
    %v1860 = vpack.c.b16 %v1732, %v1728
    %v1861 = vpack.c.b16 %v1733, %v1729
    %v1862 = vpack.c.b16 %v1734, %v1730
    %1991 = vmatprep.subr.bf16.mxu0 %v1764
    %1992 = vmatpush1.bf16.msra.mxu0 %v1763
    %1993 = vmatprep.subr.bf16.mxu0 %v1760
    %1994 = vmatpush1.bf16.msra.mxu0 %v1759
    %1995 = vmatprep.subr.bf16.mxu0 %v1756
    %1996 = vmatpush1.bf16.msra.mxu0 %v1755
    %1997 = vmatprep.subr.bf16.mxu0 %v1752
    %1998 = vmatpush1.bf16.msra.mxu0 %v1751
    %1999 = vmatprep.subr.bf16.mxu0 %v1748
    %2000 = vmatpush1.bf16.msra.mxu0 %v1747
    %2001 = vmatprep.subr.bf16.mxu0 %v1744
    %2002 = vmatpush1.bf16.msra.mxu0 %v1743
    %2003 = vmatprep.subr.bf16.mxu0 %v1740
    %2004 = vmatpush1.bf16.msra.mxu0 %v1739
    %2005 = vmatprep.subr.bf16.mxu0 %v1736
    %2006 = vmatpush1.bf16.msra.mxu0 %v1735
    %2007 = vmatprep.subr.bf16.mxu0 %v1796
    %2008 = vmatpush2.bf16.msra.mxu0 %v1795
    %2009 = vmatprep.subr.bf16.mxu0 %v1792
    %2010 = vmatpush2.bf16.msra.mxu0 %v1791
    %2011 = vmatprep.subr.bf16.mxu0 %v1788
    %2012 = vmatpush2.bf16.msra.mxu0 %v1787
    %2013 = vmatprep.subr.bf16.mxu0 %v1784
    %2014 = vmatpush2.bf16.msra.mxu0 %v1783
    %2015 = vmatprep.subr.bf16.mxu0 %v1780
    %2016 = vmatpush2.bf16.msra.mxu0 %v1779
    %2017 = vmatprep.subr.bf16.mxu0 %v1776
    %2018 = vmatpush2.bf16.msra.mxu0 %v1775
    %2019 = vmatprep.subr.bf16.mxu0 %v1772
    %2020 = vmatpush2.bf16.msra.mxu0 %v1771
    %2021 = vmatprep.subr.bf16.mxu0 %v1768
    %2022 = vmatpush2.bf16.msra.mxu0 %v1767
    %2023 = vmatprep.mubr.bf16.mxu0 %v1198
    %2024 = vmatmul.mubr.bf16.gmra.mxu0 %v1197
    %v2025 = vpop.f32.mrf.mxu0
    %v2026 = vadd.f32 %v1334, %v2025
    %v2027 = vpop.f32.mrf.mxu0
    %v2028 = vadd.f32 %v1338, %v2027
    %v2029 = vpop.f32.mrf.mxu0
    %v2030 = vpop.f32.mrf.mxu0
    %2031 = vdwg.mxu0
    %2032 = vmatprep.subr.bf16.mxu0 %v1828
    %2033 = vmatpush1.bf16.msra.mxu0 %v1827
    %2034 = vmatprep.subr.bf16.mxu0 %v1824
    %2035 = vmatpush1.bf16.msra.mxu0 %v1823
    %2036 = vmatprep.subr.bf16.mxu0 %v1820
    %2037 = vmatpush1.bf16.msra.mxu0 %v1819
    %2038 = vmatprep.subr.bf16.mxu0 %v1816
    %2039 = vmatpush1.bf16.msra.mxu0 %v1815
    %2040 = vmatprep.subr.bf16.mxu0 %v1812
    %2041 = vmatpush1.bf16.msra.mxu0 %v1811
    %2042 = vmatprep.subr.bf16.mxu0 %v1808
    %2043 = vmatpush1.bf16.msra.mxu0 %v1807
    %2044 = vmatprep.subr.bf16.mxu0 %v1804
    %2045 = vmatpush1.bf16.msra.mxu0 %v1803
    %2046 = vmatprep.subr.bf16.mxu0 %v1800
    %2047 = vmatpush1.bf16.msra.mxu0 %v1799
    %2048 = vmatprep.subr.bf16.mxu0 %v1860
    %2049 = vmatpush2.bf16.msra.mxu0 %v1859
    %2050 = vmatprep.subr.bf16.mxu0 %v1856
    %2051 = vmatpush2.bf16.msra.mxu0 %v1855
    %2052 = vmatprep.subr.bf16.mxu0 %v1852
    %2053 = vmatpush2.bf16.msra.mxu0 %v1851
    %2054 = vmatprep.subr.bf16.mxu0 %v1848
    %2055 = vmatpush2.bf16.msra.mxu0 %v1847
    %2056 = vmatprep.subr.bf16.mxu0 %v1844
    %2057 = vmatpush2.bf16.msra.mxu0 %v1843
    %2058 = vmatprep.subr.bf16.mxu0 %v1840
    %2059 = vmatpush2.bf16.msra.mxu0 %v1839
    %2060 = vmatprep.subr.bf16.mxu0 %v1836
    %2061 = vmatpush2.bf16.msra.mxu0 %v1835
    %2062 = vmatprep.subr.bf16.mxu0 %v1832
    %2063 = vmatpush2.bf16.msra.mxu0 %v1831
    %2064 = vmatprep.mubr.bf16.mxu0 %v1200
    %2065 = vmatmul.mubr.bf16.gmra.mxu0 %v1199
    %v2066 = vpop.f32.mrf.mxu0
    %v2067 = vadd.f32 %v2026, %v2066
    %v2068 = vpop.f32.mrf.mxu0
    %v2069 = vadd.f32 %v2028, %v2068
    %v2070 = vpop.f32.mrf.mxu0
    %v2071 = vpop.f32.mrf.mxu0
    %2072 = vdwg.mxu0
    %2073 = vmatprep.subr.bf16.mxu0 %v1766
    %2074 = vmatpush1.bf16.msra.mxu0 %v1765
    %2075 = vmatprep.subr.bf16.mxu0 %v1762
    %2076 = vmatpush1.bf16.msra.mxu0 %v1761
    %2077 = vmatprep.subr.bf16.mxu0 %v1758
    %2078 = vmatpush1.bf16.msra.mxu0 %v1757
    %2079 = vmatprep.subr.bf16.mxu0 %v1754
    %2080 = vmatpush1.bf16.msra.mxu0 %v1753
    %2081 = vmatprep.subr.bf16.mxu0 %v1750
    %2082 = vmatpush1.bf16.msra.mxu0 %v1749
    %2083 = vmatprep.subr.bf16.mxu0 %v1746
    %2084 = vmatpush1.bf16.msra.mxu0 %v1745
    %2085 = vmatprep.subr.bf16.mxu0 %v1742
    %2086 = vmatpush1.bf16.msra.mxu0 %v1741
    %2087 = vmatprep.subr.bf16.mxu0 %v1738
    %2088 = vmatpush1.bf16.msra.mxu0 %v1737
    %2089 = vmatprep.subr.bf16.mxu0 %v1798
    %2090 = vmatpush2.bf16.msra.mxu0 %v1797
    %2091 = vmatprep.subr.bf16.mxu0 %v1794
    %2092 = vmatpush2.bf16.msra.mxu0 %v1793
    %2093 = vmatprep.subr.bf16.mxu0 %v1790
    %2094 = vmatpush2.bf16.msra.mxu0 %v1789
    %2095 = vmatprep.subr.bf16.mxu0 %v1786
    %2096 = vmatpush2.bf16.msra.mxu0 %v1785
    %2097 = vmatprep.subr.bf16.mxu0 %v1782
    %2098 = vmatpush2.bf16.msra.mxu0 %v1781
    %2099 = vmatprep.subr.bf16.mxu0 %v1778
    %2100 = vmatpush2.bf16.msra.mxu0 %v1777
    %2101 = vmatprep.subr.bf16.mxu0 %v1774
    %2102 = vmatpush2.bf16.msra.mxu0 %v1773
    %2103 = vmatprep.subr.bf16.mxu0 %v1770
    %2104 = vmatpush2.bf16.msra.mxu0 %v1769
    %2105 = vmatprep.mubr.bf16.mxu0 %v1198
    %2106 = vmatmul.mubr.bf16.gmra.mxu0 %v1197
    %v2107 = vpop.f32.mrf.mxu0
    %v2108 = vadd.f32 %v1342, %v2107
    %v2109 = vpop.f32.mrf.mxu0
    %v2110 = vadd.f32 %v1346, %v2109
    %v2111 = vpop.f32.mrf.mxu0
    %v2112 = vpop.f32.mrf.mxu0
    %2113 = vdwg.mxu0
    %2114 = vmatprep.subr.bf16.mxu0 %v1830
    %2115 = vmatpush1.bf16.msra.mxu0 %v1829
    %2116 = vmatprep.subr.bf16.mxu0 %v1826
    %2117 = vmatpush1.bf16.msra.mxu0 %v1825
    %2118 = vmatprep.subr.bf16.mxu0 %v1822
    %2119 = vmatpush1.bf16.msra.mxu0 %v1821
    %2120 = vmatprep.subr.bf16.mxu0 %v1818
    %2121 = vmatpush1.bf16.msra.mxu0 %v1817
    %2122 = vmatprep.subr.bf16.mxu0 %v1814
    %2123 = vmatpush1.bf16.msra.mxu0 %v1813
    %2124 = vmatprep.subr.bf16.mxu0 %v1810
    %2125 = vmatpush1.bf16.msra.mxu0 %v1809
    %2126 = vmatprep.subr.bf16.mxu0 %v1806
    %2127 = vmatpush1.bf16.msra.mxu0 %v1805
    %2128 = vmatprep.subr.bf16.mxu0 %v1802
    %2129 = vmatpush1.bf16.msra.mxu0 %v1801
    %2130 = vmatprep.subr.bf16.mxu0 %v1862
    %2131 = vmatpush2.bf16.msra.mxu0 %v1861
    %2132 = vmatprep.subr.bf16.mxu0 %v1858
    %2133 = vmatpush2.bf16.msra.mxu0 %v1857
    %2134 = vmatprep.subr.bf16.mxu0 %v1854
    %2135 = vmatpush2.bf16.msra.mxu0 %v1853
    %2136 = vmatprep.subr.bf16.mxu0 %v1850
    %2137 = vmatpush2.bf16.msra.mxu0 %v1849
    %2138 = vmatprep.subr.bf16.mxu0 %v1846
    %2139 = vmatpush2.bf16.msra.mxu0 %v1845
    %2140 = vmatprep.subr.bf16.mxu0 %v1842
    %2141 = vmatpush2.bf16.msra.mxu0 %v1841
    %2142 = vmatprep.subr.bf16.mxu0 %v1838
    %2143 = vmatpush2.bf16.msra.mxu0 %v1837
    %2144 = vmatprep.subr.bf16.mxu0 %v1834
    %2145 = vmatpush2.bf16.msra.mxu0 %v1833
    %2146 = vmatprep.mubr.bf16.mxu0 %v1200
    %2147 = vmatmul.mubr.bf16.gmra.mxu0 %v1199
    %v2148 = vpop.f32.mrf.mxu0
    %v2149 = vadd.f32 %v2108, %v2148
    %v2150 = vpop.f32.mrf.mxu0
    %v2151 = vadd.f32 %v2110, %v2150
    %v2152 = vpop.f32.mrf.mxu0
    %v2153 = vpop.f32.mrf.mxu0
    %2154 = vdwg.mxu0
    %v2155 = vmax.f32 %v2067, 0.0
    %v2156 = vmax.f32 %v2069, 0.0
    %v2157 = vmax.f32 %v2149, 0.0
    %v2158 = vmax.f32 %v2151, 0.0
    %v2159 = vld [vmem:[#allocation10] sm:$0xf]
    %v2161 = vlaneseq
    %v2162 = vshrl.u32 %v2161, 7
    %v2163 = vsub.s32 0, %v2162
    %v2164 = vrot.slane %v2159, %v2163
    %v2165 = vlaneseq
    %v2166 = vshrl.u32 %v2165, 7
    %v2167 = vsub.s32 1, %v2166
    %v2168 = vrot.slane %v2159, %v2167
    %v2169 = vlaneseq
    %v2170 = vshrl.u32 %v2169, 7
    %v2171 = vsub.s32 2, %v2170
    %v2172 = vrot.slane %v2159, %v2171
    %v2173 = vlaneseq
    %v2174 = vshrl.u32 %v2173, 7
    %v2175 = vsub.s32 3, %v2174
    %v2176 = vrot.slane %v2159, %v2175
    %v2181 = vmul.f32 %v2155, %v2164
    %v2182 = vmul.f32 %v2156, %v2168
    %v2183 = vmul.f32 %v2157, %v2172
    %v2184 = vmul.f32 %v2158, %v2176
    %v2185 = vadd.f32 %v2181, %v2182
    %v2186 = vadd.f32 %v2185, %v2183
    %v2187 = vadd.f32 %v2186, %v2184
    %2188 = vadd.xlane.f32.xlu0 %v2187
    %v2189 = vpop.xlane.xlu0 %2188
    %v2190 = vld [vmem:[#allocation2] sm:$0x1]
    %v2192 = vlaneseq
    %v2193 = vshrl.u32 %v2192, 7
    %v2194 = vsub.s32 0, %v2193
    %v2195 = vrot.slane %v2190, %v2194
    %v2197 = vadd.f32 %v2189, %v2195
    %vm2198 = vcmask 7168
    %2199 = vst.msk [vmem:[%s9] sm:$0xff] %vm2198, %v2197
    // Predicated region
    $region58: #{tpu_custom_call.1} parent=1 // pred_check
      _
    $region59: #{tpu_custom_call.1} parent=1 // pred_check_branch
      %2201 = sbr.rel (0) target = $region61
    $region60: #{tpu_custom_call.1} parent=1 // pred_region
      _
    $region61: #{tpu_custom_call.1} parent=1 // pred_fallthru
      _
    // Predicated region
    $region62: #{tpu_custom_call.1} parent=1 // pred_check
      _
    $region63: #{tpu_custom_call.1} parent=1 // pred_check_branch
      %2203 = sbr.rel (0) target = $region65
    $region64: #{tpu_custom_call.1} parent=1 // pred_region
      _
    $region65: #{tpu_custom_call.1} parent=1 // pred_fallthru
      _
    %2204 = vsyncpa [#allocation4], 1
    %2205 = vsyncpa [#allocation6], 1
    %2206 = vsyncpa [#allocation9], 1

</llo_original>
